<compile_context>
chip_gen: v5e
topology: v5e:2x2
jax: 0.10.0
libtpu: 0.0.40
codegen_flags: <defaults>
</compile_context>

<pallas_src>
import jax
import jax.numpy as jnp
from jax.experimental import pallas as pl
from jax.experimental.pallas import tpu as pltpu


def _se_scale_kernel(gate_ref, x_ref, o_ref):
    # gate_ref: (TC, 1)  -- this step's per-channel gate logits
    # x_ref:    (TC, HW) -- this step's tile of per-channel spatial features
    # o_ref:    (TC, HW)
    # Sigmoid of the tiny gate in f32 (EUP), then cast to the bulk dtype so the
    # big elementwise multiply stays in x's native dtype.
    g = jax.nn.sigmoid(gate_ref[...].astype(jnp.float32))
    x = x_ref[...]
    o_ref[...] = (g.astype(x.dtype) * x).astype(o_ref.dtype)


def _sublane_tile(dtype):
    """Sublane granularity for the second-to-last block dim: 8/16/32 by width."""
    return {4: 8, 2: 16, 1: 32}.get(jnp.dtype(dtype).itemsize, 8)


def _chip_vmem_limit_bytes():
    """Scoped-VMEM limit to request: half the physical per-TC VMEM, <= 32 MiB."""
    default = 32 << 20
    try:
        info = pltpu.get_tpu_info()
        phys = getattr(info, "vmem_capacity_bytes", None)
        if phys:
            return int(min(phys // 2, default))
    except Exception:
        pass
    # Conservative fallback (also valid on v5e, whose default scoped limit is 16 MiB).
    return 16 << 20


def _min_grid_steps(rows, sublane):
    """>=2 grid steps on v7x so both TensorCores get work; 1 elsewhere."""
    if rows < 2 * sublane:
        return 1
    try:
        kind = jax.devices()[0].device_kind.lower()
    except Exception:
        return 1
    return 2 if ("v7" in kind or "7x" in kind) else 1


def _pick_row_tile(rows, hw, itemsize, *, sublane, vmem_budget_bytes,
                   min_grid=1, block_cap_bytes=2 << 20):
    """Row-tile size for the (rows, hw) elementwise pass.

    Largest multiple of `sublane` such that:
      * double-buffered x-in + out blocks plus the lane-padded (tc, 1) gate
        block fit the VMEM budget,
      * each x/out block stays under `block_cap_bytes` so large activations
        get several pipelined grid steps (DMA in/out overlap),
      * the grid has at least `min_grid` steps (v7x dual-TC sharding).
    Falls back to the full row extent (always a legal block) for tiny inputs.
    """
    bytes_per_x_row = hw * itemsize
    # 2 buffers x (x block + out block) + 2 buffers x lane-padded gate row.
    bytes_per_row = 2 * 2 * bytes_per_x_row + 2 * 128 * itemsize
    tc = min(rows,
             max(vmem_budget_bytes // bytes_per_row, 1),
             max(block_cap_bytes // bytes_per_x_row, 1))
    if min_grid > 1:
        tc = min(tc, pl.cdiv(rows, min_grid))
    if tc >= rows:
        return rows                      # full extent is always a legal block
    tc = (tc // sublane) * sublane       # sublane-aligned (8/16/32 by dtype)
    if tc <= 0:
        # Too few rows (or too tight a budget) to tile at sublane granularity.
        return rows if rows <= sublane else sublane
    return tc


def sigmoid_mul(gate_nchw, x_nchw):
    """gate_nchw: (N, C, 1, 1), x_nchw: (N, C, H, W) -> sigmoid(gate) * x."""
    N, C, H, W = x_nchw.shape
    assert gate_nchw.shape == (N, C, 1, 1)
    rows = N * C
    hw = H * W
    dtype = x_nchw.dtype
    itemsize = jnp.dtype(dtype).itemsize

    x2 = x_nchw.reshape(rows, hw)
    g2 = gate_nchw.reshape(rows, 1)

    sublane = _sublane_tile(dtype)
    vmem_limit = _chip_vmem_limit_bytes()
    min_grid = _min_grid_steps(rows, sublane)
    tc = _pick_row_tile(
        rows, hw, itemsize,
        sublane=sublane,
        vmem_budget_bytes=int(vmem_limit * 0.75),  # headroom for the compiler
        min_grid=min_grid,
    )
    grid = pl.cdiv(rows, tc)

    cost = pl.CostEstimate(
        flops=rows * hw,                                  # the gating multiply
        transcendentals=rows,                             # one sigmoid per channel
        bytes_accessed=(2 * rows * hw + rows) * itemsize,  # x in + out + gate
    )

    out2 = pl.pallas_call(
        _se_scale_kernel,
        out_shape=jax.ShapeDtypeStruct((rows, hw), dtype),
        grid_spec=pltpu.PrefetchScalarGridSpec(
            num_scalar_prefetch=0,
            grid=(grid,),
            in_specs=[
                pl.BlockSpec((tc, 1), lambda i: (i, 0)),   # blocked gate
                pl.BlockSpec((tc, hw), lambda i: (i, 0)),  # activation tile
            ],
            out_specs=pl.BlockSpec((tc, hw), lambda i: (i, 0)),
        ),
        compiler_params=pltpu.CompilerParams(
            # Row blocks are independent -> megacore-shardable (dual TC on v7x).
            dimension_semantics=("parallel",),
            vmem_limit_bytes=vmem_limit,
        ),
        cost_estimate=cost,
    )(g2, x2)

    return out2.reshape(N, C, H, W)


def _check(N, C, H, W, dtype, key, rtol, atol):
    k1, k2 = jax.random.split(key)
    x = jax.random.normal(k1, (N, C, H, W), dtype=jnp.float32).astype(dtype)
    g = jax.random.normal(k2, (N, C, 1, 1), dtype=jnp.float32).astype(dtype)

    out = sigmoid_mul(g, x)
    jax.block_until_ready(out)

    ref = (jax.nn.sigmoid(g.astype(jnp.float32)) * x.astype(jnp.float32))
    assert out.shape == (N, C, H, W)
    assert jnp.allclose(out.astype(jnp.float32), ref, rtol=rtol, atol=atol), (
        f"mismatch at shape {(N, C, H, W)} dtype {dtype}")


if __name__ == "__main__":
    key = jax.random.PRNGKey(0)
    k_a, k_b = jax.random.split(key)

    # Shapes consistent with the module: x264 = (1, 768, 14, 14),
    # x268 = (1, 768, 1, 1), f32.
    _check(1, 768, 14, 14, jnp.float32, k_a, rtol=1e-6, atol=1e-6)

    # Small bf16 check (exercises 16-sublane tiling / dtype cast path).
    _check(2, 96, 14, 14, jnp.bfloat16, k_b, rtol=2e-2, atol=2e-2)

    print("KERNEL_OK")
</pallas_src>

<mosaic_0001>
module attributes {stable_mosaic.version = 11 : i64} {
  func.func @_se_scale_kernel(%arg0: i32, %arg1: memref<768x1xf32, #tpu.memory_space<vmem>>, %arg2: memref<768x196xf32, #tpu.memory_space<vmem>>, %arg3: memref<768x196xf32, #tpu.memory_space<vmem>>) attributes {dimension_semantics = [#tpu.dimension_semantics<parallel>], iteration_bounds = array<i64: 1>, scalar_prefetch = 0 : i64, scratch_operands = 0 : i64, tpu.core_type = #tpu.core_type<tc>, window_params = [{transform_indices = @transform_0, window_bounds = array<i64: 768, 1>}, {transform_indices = @transform_1, window_bounds = array<i64: 768, 196>}, {transform_indices = @transform_2, window_bounds = array<i64: 768, 196>}]} {
    %c0 = arith.constant 0 : index
    %c0_0 = arith.constant 0 : index
    %0 = vector.load %arg1[%c0, %c0_0] : memref<768x1xf32, #tpu.memory_space<vmem>>, vector<768x1xf32>
    %1 = arith.negf %0 : vector<768x1xf32>
    %2 = math.exp %1 : vector<768x1xf32>
    %cst = arith.constant 1.000000e+00 : f32
    %3 = vector.broadcast %cst : f32 to vector<768x1xf32>
    %4 = arith.addf %3, %2 : vector<768x1xf32>
    %5 = arith.divf %3, %4 : vector<768x1xf32>
    %c0_1 = arith.constant 0 : index
    %c0_2 = arith.constant 0 : index
    %6 = vector.load %arg2[%c0_1, %c0_2] : memref<768x196xf32, #tpu.memory_space<vmem>>, vector<768x196xf32>
    %7 = vector.broadcast %5 : vector<768x1xf32> to vector<768x196xf32>
    %8 = arith.mulf %7, %6 : vector<768x196xf32>
    %c0_3 = arith.constant 0 : index
    %c0_4 = arith.constant 0 : index
    %9 = vector.load %arg3[%c0_3, %c0_4] : memref<768x196xf32, #tpu.memory_space<vmem>>, vector<768x196xf32>
    tpu.vector_store %arg3[%c0_3, %c0_4], %8 {strides = array<i32>} : memref<768x196xf32, #tpu.memory_space<vmem>>, vector<768x196xf32>,
    return
  }
  func.func @transform_0(%arg0: i32) -> (i32, i32) {
    %c0_i32 = arith.constant 0 : i32
    %c0_i32_0 = arith.constant 0 : i32
    return %arg0, %c0_i32 : i32, i32
  }
  func.func @transform_1(%arg0: i32) -> (i32, i32) {
    %c0_i32 = arith.constant 0 : i32
    %c0_i32_0 = arith.constant 0 : i32
    return %arg0, %c0_i32 : i32, i32
  }
  func.func @transform_2(%arg0: i32) -> (i32, i32) {
    %c0_i32 = arith.constant 0 : i32
    %c0_i32_0 = arith.constant 0 : i32
    return %arg0, %c0_i32 : i32, i32
  }
}

</mosaic_0001>

<llo_original>
// kernel: tpu_custom_call.1
$region0: #{tpu_custom_call.1}
  #allocation0 [shape = 'u32[]', space=smem, size = 0x4, offset = 0x4, fixed_abs, tag = 'smem constant byte address 0x4 - core index']
  #allocation1 [shape = 'u32[72,128]{1,0:T(1,128)}', space=vmem, size = 0x9000, scoped, tag = 'internal scratch']
  %s0 = inlined_call_operand.vmem [shape: f32[768,1], index: 0, kind: input, shape index: {}]
  %s1 = inlined_call_operand.vmem [shape: f32[768,196], index: 1, kind: input, shape index: {}]
  %s2 = inlined_call_operand.vmem [shape: f32[768,196], index: 2, kind: output, shape index: {}]
  %s3 = sld [smem:[#allocation0]]
  $region18: #{tpu_custom_call.1} parent=0
    _
  %s5 = ssub.s32 1, %s3
  %s6 = scalar_select 0, %s5, %s3
  // Predicated region
  $region2: #{tpu_custom_call.1} parent=0 // pred_check
    _
  $region3: #{tpu_custom_call.1} parent=0 // pred_check_branch
    %8 = sbr.rel (0) target = $region5
  $region4: #{tpu_custom_call.1} parent=0 // pred_region
    _
  $region5: #{tpu_custom_call.1} parent=0 // pred_fallthru
    _
  // Predicated region
  $region6: #{tpu_custom_call.1} parent=0 // pred_check
    _
  $region7: #{tpu_custom_call.1} parent=0 // pred_check_branch
    %10 = sbr.rel (0) target = $region9
  $region8: #{tpu_custom_call.1} parent=0 // pred_region
    _
  $region9: #{tpu_custom_call.1} parent=0 // pred_fallthru
    _
  %v11 = vld [vmem:[%s0] sm:$0xff]
  %v12 = vld [vmem:[%s0 + $0x8] sm:$0xff]
  %v13 = vld [vmem:[%s0 + $0x10] sm:$0xff]
  %v14 = vld [vmem:[%s0 + $0x18] sm:$0xff]
  %v15 = vld [vmem:[%s0 + $0x20] sm:$0xff]
  %v16 = vld [vmem:[%s0 + $0x28] sm:$0xff]
  %v17 = vld [vmem:[%s0 + $0x30] sm:$0xff]
  %v18 = vld [vmem:[%s0 + $0x38] sm:$0xff]
  %v19 = vld [vmem:[%s0 + $0x40] sm:$0xff]
  %v20 = vld [vmem:[%s0 + $0x48] sm:$0xff]
  %v21 = vld [vmem:[%s0 + $0x50] sm:$0xff]
  %v22 = vld [vmem:[%s0 + $0x58] sm:$0xff]
  %v23 = vld [vmem:[%s0 + $0x60] sm:$0xff]
  %v24 = vld [vmem:[%s0 + $0x68] sm:$0xff]
  %v25 = vld [vmem:[%s0 + $0x70] sm:$0xff]
  %v26 = vld [vmem:[%s0 + $0x78] sm:$0xff]
  %v27 = vld [vmem:[%s0 + $0x80] sm:$0xff]
  %v28 = vld [vmem:[%s0 + $0x88] sm:$0xff]
  %v29 = vld [vmem:[%s0 + $0x90] sm:$0xff]
  %v30 = vld [vmem:[%s0 + $0x98] sm:$0xff]
  %v31 = vld [vmem:[%s0 + $0xa0] sm:$0xff]
  %v32 = vld [vmem:[%s0 + $0xa8] sm:$0xff]
  %v33 = vld [vmem:[%s0 + $0xb0] sm:$0xff]
  %v34 = vld [vmem:[%s0 + $0xb8] sm:$0xff]
  %v35 = vld [vmem:[%s0 + $0xc0] sm:$0xff]
  %v36 = vld [vmem:[%s0 + $0xc8] sm:$0xff]
  %v37 = vld [vmem:[%s0 + $0xd0] sm:$0xff]
  %v38 = vld [vmem:[%s0 + $0xd8] sm:$0xff]
  %v39 = vld [vmem:[%s0 + $0xe0] sm:$0xff]
  %v40 = vld [vmem:[%s0 + $0xe8] sm:$0xff]
  %v41 = vld [vmem:[%s0 + $0xf0] sm:$0xff]
  %v42 = vld [vmem:[%s0 + $0xf8] sm:$0xff]
  %v43 = vld [vmem:[%s0 + $0x100] sm:$0xff]
  %v44 = vld [vmem:[%s0 + $0x108] sm:$0xff]
  %v45 = vld [vmem:[%s0 + $0x110] sm:$0xff]
  %v46 = vld [vmem:[%s0 + $0x118] sm:$0xff]
  %v47 = vld [vmem:[%s0 + $0x120] sm:$0xff]
  %v48 = vld [vmem:[%s0 + $0x128] sm:$0xff]
  %v49 = vld [vmem:[%s0 + $0x130] sm:$0xff]
  %v50 = vld [vmem:[%s0 + $0x138] sm:$0xff]
  %v51 = vld [vmem:[%s0 + $0x140] sm:$0xff]
  %v52 = vld [vmem:[%s0 + $0x148] sm:$0xff]
  %v53 = vld [vmem:[%s0 + $0x150] sm:$0xff]
  %v54 = vld [vmem:[%s0 + $0x158] sm:$0xff]
  %v55 = vld [vmem:[%s0 + $0x160] sm:$0xff]
  %v56 = vld [vmem:[%s0 + $0x168] sm:$0xff]
  %v57 = vld [vmem:[%s0 + $0x170] sm:$0xff]
  %v58 = vld [vmem:[%s0 + $0x178] sm:$0xff]
  %v59 = vld [vmem:[%s0 + $0x180] sm:$0xff]
  %v60 = vld [vmem:[%s0 + $0x188] sm:$0xff]
  %v61 = vld [vmem:[%s0 + $0x190] sm:$0xff]
  %v62 = vld [vmem:[%s0 + $0x198] sm:$0xff]
  %v63 = vld [vmem:[%s0 + $0x1a0] sm:$0xff]
  %v64 = vld [vmem:[%s0 + $0x1a8] sm:$0xff]
  %v65 = vld [vmem:[%s0 + $0x1b0] sm:$0xff]
  %v66 = vld [vmem:[%s0 + $0x1b8] sm:$0xff]
  %v67 = vld [vmem:[%s0 + $0x1c0] sm:$0xff]
  %v68 = vld [vmem:[%s0 + $0x1c8] sm:$0xff]
  %v69 = vld [vmem:[%s0 + $0x1d0] sm:$0xff]
  %v70 = vld [vmem:[%s0 + $0x1d8] sm:$0xff]
  %v71 = vld [vmem:[%s0 + $0x1e0] sm:$0xff]
  %v72 = vld [vmem:[%s0 + $0x1e8] sm:$0xff]
  %v73 = vld [vmem:[%s0 + $0x1f0] sm:$0xff]
  %v74 = vld [vmem:[%s0 + $0x1f8] sm:$0xff]
  %v75 = vld [vmem:[%s0 + $0x200] sm:$0xff]
  %v76 = vld [vmem:[%s0 + $0x208] sm:$0xff]
  %v77 = vld [vmem:[%s0 + $0x210] sm:$0xff]
  %v78 = vld [vmem:[%s0 + $0x218] sm:$0xff]
  %v79 = vld [vmem:[%s0 + $0x220] sm:$0xff]
  %v80 = vld [vmem:[%s0 + $0x228] sm:$0xff]
  %v81 = vld [vmem:[%s0 + $0x230] sm:$0xff]
  %v82 = vld [vmem:[%s0 + $0x238] sm:$0xff]
  %v83 = vld [vmem:[%s0 + $0x240] sm:$0xff]
  %v84 = vld [vmem:[%s0 + $0x248] sm:$0xff]
  %v85 = vld [vmem:[%s0 + $0x250] sm:$0xff]
  %v86 = vld [vmem:[%s0 + $0x258] sm:$0xff]
  %v87 = vld [vmem:[%s0 + $0x260] sm:$0xff]
  %v88 = vld [vmem:[%s0 + $0x268] sm:$0xff]
  %v89 = vld [vmem:[%s0 + $0x270] sm:$0xff]
  %v90 = vld [vmem:[%s0 + $0x278] sm:$0xff]
  %v91 = vld [vmem:[%s0 + $0x280] sm:$0xff]
  %v92 = vld [vmem:[%s0 + $0x288] sm:$0xff]
  %v93 = vld [vmem:[%s0 + $0x290] sm:$0xff]
  %v94 = vld [vmem:[%s0 + $0x298] sm:$0xff]
  %v95 = vld [vmem:[%s0 + $0x2a0] sm:$0xff]
  %v96 = vld [vmem:[%s0 + $0x2a8] sm:$0xff]
  %v97 = vld [vmem:[%s0 + $0x2b0] sm:$0xff]
  %v98 = vld [vmem:[%s0 + $0x2b8] sm:$0xff]
  %v99 = vld [vmem:[%s0 + $0x2c0] sm:$0xff]
  %v100 = vld [vmem:[%s0 + $0x2c8] sm:$0xff]
  %v101 = vld [vmem:[%s0 + $0x2d0] sm:$0xff]
  %v102 = vld [vmem:[%s0 + $0x2d8] sm:$0xff]
  %v103 = vld [vmem:[%s0 + $0x2e0] sm:$0xff]
  %v104 = vld [vmem:[%s0 + $0x2e8] sm:$0xff]
  %v105 = vld [vmem:[%s0 + $0x2f0] sm:$0xff]
  %v106 = vld [vmem:[%s0 + $0x2f8] sm:$0xff]
  %v107 = vxor.u32 %v11, 2147483648
  %v108 = vxor.u32 %v12, 2147483648
  %v109 = vxor.u32 %v13, 2147483648
  %v110 = vxor.u32 %v14, 2147483648
  %v111 = vxor.u32 %v15, 2147483648
  %v112 = vxor.u32 %v16, 2147483648
  %v113 = vxor.u32 %v17, 2147483648
  %v114 = vxor.u32 %v18, 2147483648
  %v115 = vxor.u32 %v19, 2147483648
  %v116 = vxor.u32 %v20, 2147483648
  %v117 = vxor.u32 %v21, 2147483648
  %v118 = vxor.u32 %v22, 2147483648
  %v119 = vxor.u32 %v23, 2147483648
  %v120 = vxor.u32 %v24, 2147483648
  %v121 = vxor.u32 %v25, 2147483648
  %v122 = vxor.u32 %v26, 2147483648
  %v123 = vxor.u32 %v27, 2147483648
  %v124 = vxor.u32 %v28, 2147483648
  %v125 = vxor.u32 %v29, 2147483648
  %v126 = vxor.u32 %v30, 2147483648
  %v127 = vxor.u32 %v31, 2147483648
  %v128 = vxor.u32 %v32, 2147483648
  %v129 = vxor.u32 %v33, 2147483648
  %v130 = vxor.u32 %v34, 2147483648
  %v131 = vxor.u32 %v35, 2147483648
  %v132 = vxor.u32 %v36, 2147483648
  %v133 = vxor.u32 %v37, 2147483648
  %v134 = vxor.u32 %v38, 2147483648
  %v135 = vxor.u32 %v39, 2147483648
  %v136 = vxor.u32 %v40, 2147483648
  %v137 = vxor.u32 %v41, 2147483648
  %v138 = vxor.u32 %v42, 2147483648
  %v139 = vxor.u32 %v43, 2147483648
  %v140 = vxor.u32 %v44, 2147483648
  %v141 = vxor.u32 %v45, 2147483648
  %v142 = vxor.u32 %v46, 2147483648
  %v143 = vxor.u32 %v47, 2147483648
  %v144 = vxor.u32 %v48, 2147483648
  %v145 = vxor.u32 %v49, 2147483648
  %v146 = vxor.u32 %v50, 2147483648
  %v147 = vxor.u32 %v51, 2147483648
  %v148 = vxor.u32 %v52, 2147483648
  %v149 = vxor.u32 %v53, 2147483648
  %v150 = vxor.u32 %v54, 2147483648
  %v151 = vxor.u32 %v55, 2147483648
  %v152 = vxor.u32 %v56, 2147483648
  %v153 = vxor.u32 %v57, 2147483648
  %v154 = vxor.u32 %v58, 2147483648
  %v155 = vxor.u32 %v59, 2147483648
  %v156 = vxor.u32 %v60, 2147483648
  %v157 = vxor.u32 %v61, 2147483648
  %v158 = vxor.u32 %v62, 2147483648
  %v159 = vxor.u32 %v63, 2147483648
  %v160 = vxor.u32 %v64, 2147483648
  %v161 = vxor.u32 %v65, 2147483648
  %v162 = vxor.u32 %v66, 2147483648
  %v163 = vxor.u32 %v67, 2147483648
  %v164 = vxor.u32 %v68, 2147483648
  %v165 = vxor.u32 %v69, 2147483648
  %v166 = vxor.u32 %v70, 2147483648
  %v167 = vxor.u32 %v71, 2147483648
  %v168 = vxor.u32 %v72, 2147483648
  %v169 = vxor.u32 %v73, 2147483648
  %v170 = vxor.u32 %v74, 2147483648
  %v171 = vxor.u32 %v75, 2147483648
  %v172 = vxor.u32 %v76, 2147483648
  %v173 = vxor.u32 %v77, 2147483648
  %v174 = vxor.u32 %v78, 2147483648
  %v175 = vxor.u32 %v79, 2147483648
  %v176 = vxor.u32 %v80, 2147483648
  %v177 = vxor.u32 %v81, 2147483648
  %v178 = vxor.u32 %v82, 2147483648
  %v179 = vxor.u32 %v83, 2147483648
  %v180 = vxor.u32 %v84, 2147483648
  %v181 = vxor.u32 %v85, 2147483648
  %v182 = vxor.u32 %v86, 2147483648
  %v183 = vxor.u32 %v87, 2147483648
  %v184 = vxor.u32 %v88, 2147483648
  %v185 = vxor.u32 %v89, 2147483648
  %v186 = vxor.u32 %v90, 2147483648
  %v187 = vxor.u32 %v91, 2147483648
  %v188 = vxor.u32 %v92, 2147483648
  %v189 = vxor.u32 %v93, 2147483648
  %v190 = vxor.u32 %v94, 2147483648
  %v191 = vxor.u32 %v95, 2147483648
  %v192 = vxor.u32 %v96, 2147483648
  %v193 = vxor.u32 %v97, 2147483648
  %v194 = vxor.u32 %v98, 2147483648
  %v195 = vxor.u32 %v99, 2147483648
  %v196 = vxor.u32 %v100, 2147483648
  %v197 = vxor.u32 %v101, 2147483648
  %v198 = vxor.u32 %v102, 2147483648
  %v199 = vxor.u32 %v103, 2147483648
  %v200 = vxor.u32 %v104, 2147483648
  %v201 = vxor.u32 %v105, 2147483648
  %v202 = vxor.u32 %v106, 2147483648
  %v203 = vmul.f32 %v107, 1.442695
  %v204 = vpow.pop %v203
  %v205 = vmul.f32 %v108, 1.442695
  %v206 = vpow.pop %v205
  %v207 = vmul.f32 %v109, 1.442695
  %v208 = vpow.pop %v207
  %v209 = vmul.f32 %v110, 1.442695
  %v210 = vpow.pop %v209
  %v211 = vmul.f32 %v111, 1.442695
  %v212 = vpow.pop %v211
  %v213 = vmul.f32 %v112, 1.442695
  %v214 = vpow.pop %v213
  %v215 = vmul.f32 %v113, 1.442695
  %v216 = vpow.pop %v215
  %v217 = vmul.f32 %v114, 1.442695
  %v218 = vpow.pop %v217
  %v219 = vmul.f32 %v115, 1.442695
  %v220 = vpow.pop %v219
  %v221 = vmul.f32 %v116, 1.442695
  %v222 = vpow.pop %v221
  %v223 = vmul.f32 %v117, 1.442695
  %v224 = vpow.pop %v223
  %v225 = vmul.f32 %v118, 1.442695
  %v226 = vpow.pop %v225
  %v227 = vmul.f32 %v119, 1.442695
  %v228 = vpow.pop %v227
  %v229 = vmul.f32 %v120, 1.442695
  %v230 = vpow.pop %v229
  %v231 = vmul.f32 %v121, 1.442695
  %v232 = vpow.pop %v231
  %v233 = vmul.f32 %v122, 1.442695
  %v234 = vpow.pop %v233
  %v235 = vmul.f32 %v123, 1.442695
  %v236 = vpow.pop %v235
  %v237 = vmul.f32 %v124, 1.442695
  %v238 = vpow.pop %v237
  %v239 = vmul.f32 %v125, 1.442695
  %v240 = vpow.pop %v239
  %v241 = vmul.f32 %v126, 1.442695
  %v242 = vpow.pop %v241
  %v243 = vmul.f32 %v127, 1.442695
  %v244 = vpow.pop %v243
  %v245 = vmul.f32 %v128, 1.442695
  %v246 = vpow.pop %v245
  %v247 = vmul.f32 %v129, 1.442695
  %v248 = vpow.pop %v247
  %v249 = vmul.f32 %v130, 1.442695
  %v250 = vpow.pop %v249
  %v251 = vmul.f32 %v131, 1.442695
  %v252 = vpow.pop %v251
  %v253 = vmul.f32 %v132, 1.442695
  %v254 = vpow.pop %v253
  %v255 = vmul.f32 %v133, 1.442695
  %v256 = vpow.pop %v255
  %v257 = vmul.f32 %v134, 1.442695
  %v258 = vpow.pop %v257
  %v259 = vmul.f32 %v135, 1.442695
  %v260 = vpow.pop %v259
  %v261 = vmul.f32 %v136, 1.442695
  %v262 = vpow.pop %v261
  %v263 = vmul.f32 %v137, 1.442695
  %v264 = vpow.pop %v263
  %v265 = vmul.f32 %v138, 1.442695
  %v266 = vpow.pop %v265
  %v267 = vmul.f32 %v139, 1.442695
  %v268 = vpow.pop %v267
  %v269 = vmul.f32 %v140, 1.442695
  %v270 = vpow.pop %v269
  %v271 = vmul.f32 %v141, 1.442695
  %v272 = vpow.pop %v271
  %v273 = vmul.f32 %v142, 1.442695
  %v274 = vpow.pop %v273
  %v275 = vmul.f32 %v143, 1.442695
  %v276 = vpow.pop %v275
  %v277 = vmul.f32 %v144, 1.442695
  %v278 = vpow.pop %v277
  %v279 = vmul.f32 %v145, 1.442695
  %v280 = vpow.pop %v279
  %v281 = vmul.f32 %v146, 1.442695
  %v282 = vpow.pop %v281
  %v283 = vmul.f32 %v147, 1.442695
  %v284 = vpow.pop %v283
  %v285 = vmul.f32 %v148, 1.442695
  %v286 = vpow.pop %v285
  %v287 = vmul.f32 %v149, 1.442695
  %v288 = vpow.pop %v287
  %v289 = vmul.f32 %v150, 1.442695
  %v290 = vpow.pop %v289
  %v291 = vmul.f32 %v151, 1.442695
  %v292 = vpow.pop %v291
  %v293 = vmul.f32 %v152, 1.442695
  %v294 = vpow.pop %v293
  %v295 = vmul.f32 %v153, 1.442695
  %v296 = vpow.pop %v295
  %v297 = vmul.f32 %v154, 1.442695
  %v298 = vpow.pop %v297
  %v299 = vmul.f32 %v155, 1.442695
  %v300 = vpow.pop %v299
  %v301 = vmul.f32 %v156, 1.442695
  %v302 = vpow.pop %v301
  %v303 = vmul.f32 %v157, 1.442695
  %v304 = vpow.pop %v303
  %v305 = vmul.f32 %v158, 1.442695
  %v306 = vpow.pop %v305
  %v307 = vmul.f32 %v159, 1.442695
  %v308 = vpow.pop %v307
  %v309 = vmul.f32 %v160, 1.442695
  %v310 = vpow.pop %v309
  %v311 = vmul.f32 %v161, 1.442695
  %v312 = vpow.pop %v311
  %v313 = vmul.f32 %v162, 1.442695
  %v314 = vpow.pop %v313
  %v315 = vmul.f32 %v163, 1.442695
  %v316 = vpow.pop %v315
  %v317 = vmul.f32 %v164, 1.442695
  %v318 = vpow.pop %v317
  %v319 = vmul.f32 %v165, 1.442695
  %v320 = vpow.pop %v319
  %v321 = vmul.f32 %v166, 1.442695
  %v322 = vpow.pop %v321
  %v323 = vmul.f32 %v167, 1.442695
  %v324 = vpow.pop %v323
  %v325 = vmul.f32 %v168, 1.442695
  %v326 = vpow.pop %v325
  %v327 = vmul.f32 %v169, 1.442695
  %v328 = vpow.pop %v327
  %v329 = vmul.f32 %v170, 1.442695
  %v330 = vpow.pop %v329
  %v331 = vmul.f32 %v171, 1.442695
  %v332 = vpow.pop %v331
  %v333 = vmul.f32 %v172, 1.442695
  %v334 = vpow.pop %v333
  %v335 = vmul.f32 %v173, 1.442695
  %v336 = vpow.pop %v335
  %v337 = vmul.f32 %v174, 1.442695
  %v338 = vpow.pop %v337
  %v339 = vmul.f32 %v175, 1.442695
  %v340 = vpow.pop %v339
  %v341 = vmul.f32 %v176, 1.442695
  %v342 = vpow.pop %v341
  %v343 = vmul.f32 %v177, 1.442695
  %v344 = vpow.pop %v343
  %v345 = vmul.f32 %v178, 1.442695
  %v346 = vpow.pop %v345
  %v347 = vmul.f32 %v179, 1.442695
  %v348 = vpow.pop %v347
  %v349 = vmul.f32 %v180, 1.442695
  %v350 = vpow.pop %v349
  %v351 = vmul.f32 %v181, 1.442695
  %v352 = vpow.pop %v351
  %v353 = vmul.f32 %v182, 1.442695
  %v354 = vpow.pop %v353
  %v355 = vmul.f32 %v183, 1.442695
  %v356 = vpow.pop %v355
  %v357 = vmul.f32 %v184, 1.442695
  %v358 = vpow.pop %v357
  %v359 = vmul.f32 %v185, 1.442695
  %v360 = vpow.pop %v359
  %v361 = vmul.f32 %v186, 1.442695
  %v362 = vpow.pop %v361
  %v363 = vmul.f32 %v187, 1.442695
  %v364 = vpow.pop %v363
  %v365 = vmul.f32 %v188, 1.442695
  %v366 = vpow.pop %v365
  %v367 = vmul.f32 %v189, 1.442695
  %v368 = vpow.pop %v367
  %v369 = vmul.f32 %v190, 1.442695
  %v370 = vpow.pop %v369
  %v371 = vmul.f32 %v191, 1.442695
  %v372 = vpow.pop %v371
  %v373 = vmul.f32 %v192, 1.442695
  %v374 = vpow.pop %v373
  %v375 = vmul.f32 %v193, 1.442695
  %v376 = vpow.pop %v375
  %v377 = vmul.f32 %v194, 1.442695
  %v378 = vpow.pop %v377
  %v379 = vmul.f32 %v195, 1.442695
  %v380 = vpow.pop %v379
  %v381 = vmul.f32 %v196, 1.442695
  %v382 = vpow.pop %v381
  %v383 = vmul.f32 %v197, 1.442695
  %v384 = vpow.pop %v383
  %v385 = vmul.f32 %v198, 1.442695
  %v386 = vpow.pop %v385
  %v387 = vmul.f32 %v199, 1.442695
  %v388 = vpow.pop %v387
  %v389 = vmul.f32 %v200, 1.442695
  %v390 = vpow.pop %v389
  %v391 = vmul.f32 %v201, 1.442695
  %v392 = vpow.pop %v391
  %v393 = vmul.f32 %v202, 1.442695
  %v394 = vpow.pop %v393
  %v395 = vadd.f32 %v204, 1.0
  %v396 = vadd.f32 %v206, 1.0
  %v397 = vadd.f32 %v208, 1.0
  %v398 = vadd.f32 %v210, 1.0
  %v399 = vadd.f32 %v212, 1.0
  %v400 = vadd.f32 %v214, 1.0
  %v401 = vadd.f32 %v216, 1.0
  %v402 = vadd.f32 %v218, 1.0
  %v403 = vadd.f32 %v220, 1.0
  %v404 = vadd.f32 %v222, 1.0
  %v405 = vadd.f32 %v224, 1.0
  %v406 = vadd.f32 %v226, 1.0
  %v407 = vadd.f32 %v228, 1.0
  %v408 = vadd.f32 %v230, 1.0
  %v409 = vadd.f32 %v232, 1.0
  %v410 = vadd.f32 %v234, 1.0
  %v411 = vadd.f32 %v236, 1.0
  %v412 = vadd.f32 %v238, 1.0
  %v413 = vadd.f32 %v240, 1.0
  %v414 = vadd.f32 %v242, 1.0
  %v415 = vadd.f32 %v244, 1.0
  %v416 = vadd.f32 %v246, 1.0
  %v417 = vadd.f32 %v248, 1.0
  %v418 = vadd.f32 %v250, 1.0
  %v419 = vadd.f32 %v252, 1.0
  %v420 = vadd.f32 %v254, 1.0
  %v421 = vadd.f32 %v256, 1.0
  %v422 = vadd.f32 %v258, 1.0
  %v423 = vadd.f32 %v260, 1.0
  %v424 = vadd.f32 %v262, 1.0
  %v425 = vadd.f32 %v264, 1.0
  %v426 = vadd.f32 %v266, 1.0
  %v427 = vadd.f32 %v268, 1.0
  %v428 = vadd.f32 %v270, 1.0
  %v429 = vadd.f32 %v272, 1.0
  %v430 = vadd.f32 %v274, 1.0
  %v431 = vadd.f32 %v276, 1.0
  %v432 = vadd.f32 %v278, 1.0
  %v433 = vadd.f32 %v280, 1.0
  %v434 = vadd.f32 %v282, 1.0
  %v435 = vadd.f32 %v284, 1.0
  %v436 = vadd.f32 %v286, 1.0
  %v437 = vadd.f32 %v288, 1.0
  %v438 = vadd.f32 %v290, 1.0
  %v439 = vadd.f32 %v292, 1.0
  %v440 = vadd.f32 %v294, 1.0
  %v441 = vadd.f32 %v296, 1.0
  %v442 = vadd.f32 %v298, 1.0
  %v443 = vadd.f32 %v300, 1.0
  %v444 = vadd.f32 %v302, 1.0
  %v445 = vadd.f32 %v304, 1.0
  %v446 = vadd.f32 %v306, 1.0
  %v447 = vadd.f32 %v308, 1.0
  %v448 = vadd.f32 %v310, 1.0
  %v449 = vadd.f32 %v312, 1.0
  %v450 = vadd.f32 %v314, 1.0
  %v451 = vadd.f32 %v316, 1.0
  %v452 = vadd.f32 %v318, 1.0
  %v453 = vadd.f32 %v320, 1.0
  %v454 = vadd.f32 %v322, 1.0
  %v455 = vadd.f32 %v324, 1.0
  %v456 = vadd.f32 %v326, 1.0
  %v457 = vadd.f32 %v328, 1.0
  %v458 = vadd.f32 %v330, 1.0
  %v459 = vadd.f32 %v332, 1.0
  %v460 = vadd.f32 %v334, 1.0
  %v461 = vadd.f32 %v336, 1.0
  %v462 = vadd.f32 %v338, 1.0
  %v463 = vadd.f32 %v340, 1.0
  %v464 = vadd.f32 %v342, 1.0
  %v465 = vadd.f32 %v344, 1.0
  %v466 = vadd.f32 %v346, 1.0
  %v467 = vadd.f32 %v348, 1.0
  %v468 = vadd.f32 %v350, 1.0
  %v469 = vadd.f32 %v352, 1.0
  %v470 = vadd.f32 %v354, 1.0
  %v471 = vadd.f32 %v356, 1.0
  %v472 = vadd.f32 %v358, 1.0
  %v473 = vadd.f32 %v360, 1.0
  %v474 = vadd.f32 %v362, 1.0
  %v475 = vadd.f32 %v364, 1.0
  %v476 = vadd.f32 %v366, 1.0
  %v477 = vadd.f32 %v368, 1.0
  %v478 = vadd.f32 %v370, 1.0
  %v479 = vadd.f32 %v372, 1.0
  %v480 = vadd.f32 %v374, 1.0
  %v481 = vadd.f32 %v376, 1.0
  %v482 = vadd.f32 %v378, 1.0
  %v483 = vadd.f32 %v380, 1.0
  %v484 = vadd.f32 %v382, 1.0
  %v485 = vadd.f32 %v384, 1.0
  %v486 = vadd.f32 %v386, 1.0
  %v487 = vadd.f32 %v388, 1.0
  %v488 = vadd.f32 %v390, 1.0
  %v489 = vadd.f32 %v392, 1.0
  %v490 = vadd.f32 %v394, 1.0
  %v491 = vrcp.pop %v395
  %v492 = vmul.f32 %v395, %v491
  %v493 = vsub.f32 1.0, %v492
  %v494 = vmul.f32 %v491, %v493
  %v495 = vadd.f32 %v491, %v494
  %vm496 = vweird.f32 %v395
  %vm497 = vweird.f32 %v491
  %vm498 = vmor %vm496, %vm497
  %v499 = vsel %vm498, %v491, %v495
  %v500 = vand.u32 2147483647, %v395
  %vm501 = vcmp.eq.f32.partialorder %v500, 8.507059e+37
  %v502 = vand.u32 %v395, 2147483648
  %v503 = vor.u32 1.1754944e-38, %v502
  %v504 = vsel %vm501, %v503, %v499
  %v505 = vmul.f32 1.0, %v504
  %v506 = vrcp.pop %v396
  %v507 = vmul.f32 %v396, %v506
  %v508 = vsub.f32 1.0, %v507
  %v509 = vmul.f32 %v506, %v508
  %v510 = vadd.f32 %v506, %v509
  %vm511 = vweird.f32 %v396
  %vm512 = vweird.f32 %v506
  %vm513 = vmor %vm511, %vm512
  %v514 = vsel %vm513, %v506, %v510
  %v515 = vand.u32 2147483647, %v396
  %vm516 = vcmp.eq.f32.partialorder %v515, 8.507059e+37
  %v517 = vand.u32 %v396, 2147483648
  %v518 = vor.u32 1.1754944e-38, %v517
  %v519 = vsel %vm516, %v518, %v514
  %v520 = vmul.f32 1.0, %v519
  %v521 = vrcp.pop %v397
  %v522 = vmul.f32 %v397, %v521
  %v523 = vsub.f32 1.0, %v522
  %v524 = vmul.f32 %v521, %v523
  %v525 = vadd.f32 %v521, %v524
  %vm526 = vweird.f32 %v397
  %vm527 = vweird.f32 %v521
  %vm528 = vmor %vm526, %vm527
  %v529 = vsel %vm528, %v521, %v525
  %v530 = vand.u32 2147483647, %v397
  %vm531 = vcmp.eq.f32.partialorder %v530, 8.507059e+37
  %v532 = vand.u32 %v397, 2147483648
  %v533 = vor.u32 1.1754944e-38, %v532
  %v534 = vsel %vm531, %v533, %v529
  %v535 = vmul.f32 1.0, %v534
  %v536 = vrcp.pop %v398
  %v537 = vmul.f32 %v398, %v536
  %v538 = vsub.f32 1.0, %v537
  %v539 = vmul.f32 %v536, %v538
  %v540 = vadd.f32 %v536, %v539
  %vm541 = vweird.f32 %v398
  %vm542 = vweird.f32 %v536
  %vm543 = vmor %vm541, %vm542
  %v544 = vsel %vm543, %v536, %v540
  %v545 = vand.u32 2147483647, %v398
  %vm546 = vcmp.eq.f32.partialorder %v545, 8.507059e+37
  %v547 = vand.u32 %v398, 2147483648
  %v548 = vor.u32 1.1754944e-38, %v547
  %v549 = vsel %vm546, %v548, %v544
  %v550 = vmul.f32 1.0, %v549
  %v551 = vrcp.pop %v399
  %v552 = vmul.f32 %v399, %v551
  %v553 = vsub.f32 1.0, %v552
  %v554 = vmul.f32 %v551, %v553
  %v555 = vadd.f32 %v551, %v554
  %vm556 = vweird.f32 %v399
  %vm557 = vweird.f32 %v551
  %vm558 = vmor %vm556, %vm557
  %v559 = vsel %vm558, %v551, %v555
  %v560 = vand.u32 2147483647, %v399
  %vm561 = vcmp.eq.f32.partialorder %v560, 8.507059e+37
  %v562 = vand.u32 %v399, 2147483648
  %v563 = vor.u32 1.1754944e-38, %v562
  %v564 = vsel %vm561, %v563, %v559
  %v565 = vmul.f32 1.0, %v564
  %v566 = vrcp.pop %v400
  %v567 = vmul.f32 %v400, %v566
  %v568 = vsub.f32 1.0, %v567
  %v569 = vmul.f32 %v566, %v568
  %v570 = vadd.f32 %v566, %v569
  %vm571 = vweird.f32 %v400
  %vm572 = vweird.f32 %v566
  %vm573 = vmor %vm571, %vm572
  %v574 = vsel %vm573, %v566, %v570
  %v575 = vand.u32 2147483647, %v400
  %vm576 = vcmp.eq.f32.partialorder %v575, 8.507059e+37
  %v577 = vand.u32 %v400, 2147483648
  %v578 = vor.u32 1.1754944e-38, %v577
  %v579 = vsel %vm576, %v578, %v574
  %v580 = vmul.f32 1.0, %v579
  %v581 = vrcp.pop %v401
  %v582 = vmul.f32 %v401, %v581
  %v583 = vsub.f32 1.0, %v582
  %v584 = vmul.f32 %v581, %v583
  %v585 = vadd.f32 %v581, %v584
  %vm586 = vweird.f32 %v401
  %vm587 = vweird.f32 %v581
  %vm588 = vmor %vm586, %vm587
  %v589 = vsel %vm588, %v581, %v585
  %v590 = vand.u32 2147483647, %v401
  %vm591 = vcmp.eq.f32.partialorder %v590, 8.507059e+37
  %v592 = vand.u32 %v401, 2147483648
  %v593 = vor.u32 1.1754944e-38, %v592
  %v594 = vsel %vm591, %v593, %v589
  %v595 = vmul.f32 1.0, %v594
  %v596 = vrcp.pop %v402
  %v597 = vmul.f32 %v402, %v596
  %v598 = vsub.f32 1.0, %v597
  %v599 = vmul.f32 %v596, %v598
  %v600 = vadd.f32 %v596, %v599
  %vm601 = vweird.f32 %v402
  %vm602 = vweird.f32 %v596
  %vm603 = vmor %vm601, %vm602
  %v604 = vsel %vm603, %v596, %v600
  %v605 = vand.u32 2147483647, %v402
  %vm606 = vcmp.eq.f32.partialorder %v605, 8.507059e+37
  %v607 = vand.u32 %v402, 2147483648
  %v608 = vor.u32 1.1754944e-38, %v607
  %v609 = vsel %vm606, %v608, %v604
  %v610 = vmul.f32 1.0, %v609
  %v611 = vrcp.pop %v403
  %v612 = vmul.f32 %v403, %v611
  %v613 = vsub.f32 1.0, %v612
  %v614 = vmul.f32 %v611, %v613
  %v615 = vadd.f32 %v611, %v614
  %vm616 = vweird.f32 %v403
  %vm617 = vweird.f32 %v611
  %vm618 = vmor %vm616, %vm617
  %v619 = vsel %vm618, %v611, %v615
  %v620 = vand.u32 2147483647, %v403
  %vm621 = vcmp.eq.f32.partialorder %v620, 8.507059e+37
  %v622 = vand.u32 %v403, 2147483648
  %v623 = vor.u32 1.1754944e-38, %v622
  %v624 = vsel %vm621, %v623, %v619
  %v625 = vmul.f32 1.0, %v624
  %v626 = vrcp.pop %v404
  %v627 = vmul.f32 %v404, %v626
  %v628 = vsub.f32 1.0, %v627
  %v629 = vmul.f32 %v626, %v628
  %v630 = vadd.f32 %v626, %v629
  %vm631 = vweird.f32 %v404
  %vm632 = vweird.f32 %v626
  %vm633 = vmor %vm631, %vm632
  %v634 = vsel %vm633, %v626, %v630
  %v635 = vand.u32 2147483647, %v404
  %vm636 = vcmp.eq.f32.partialorder %v635, 8.507059e+37
  %v637 = vand.u32 %v404, 2147483648
  %v638 = vor.u32 1.1754944e-38, %v637
  %v639 = vsel %vm636, %v638, %v634
  %v640 = vmul.f32 1.0, %v639
  %v641 = vrcp.pop %v405
  %v642 = vmul.f32 %v405, %v641
  %v643 = vsub.f32 1.0, %v642
  %v644 = vmul.f32 %v641, %v643
  %v645 = vadd.f32 %v641, %v644
  %vm646 = vweird.f32 %v405
  %vm647 = vweird.f32 %v641
  %vm648 = vmor %vm646, %vm647
  %v649 = vsel %vm648, %v641, %v645
  %v650 = vand.u32 2147483647, %v405
  %vm651 = vcmp.eq.f32.partialorder %v650, 8.507059e+37
  %v652 = vand.u32 %v405, 2147483648
  %v653 = vor.u32 1.1754944e-38, %v652
  %v654 = vsel %vm651, %v653, %v649
  %v655 = vmul.f32 1.0, %v654
  %v656 = vrcp.pop %v406
  %v657 = vmul.f32 %v406, %v656
  %v658 = vsub.f32 1.0, %v657
  %v659 = vmul.f32 %v656, %v658
  %v660 = vadd.f32 %v656, %v659
  %vm661 = vweird.f32 %v406
  %vm662 = vweird.f32 %v656
  %vm663 = vmor %vm661, %vm662
  %v664 = vsel %vm663, %v656, %v660
  %v665 = vand.u32 2147483647, %v406
  %vm666 = vcmp.eq.f32.partialorder %v665, 8.507059e+37
  %v667 = vand.u32 %v406, 2147483648
  %v668 = vor.u32 1.1754944e-38, %v667
  %v669 = vsel %vm666, %v668, %v664
  %v670 = vmul.f32 1.0, %v669
  %v671 = vrcp.pop %v407
  %v672 = vmul.f32 %v407, %v671
  %v673 = vsub.f32 1.0, %v672
  %v674 = vmul.f32 %v671, %v673
  %v675 = vadd.f32 %v671, %v674
  %vm676 = vweird.f32 %v407
  %vm677 = vweird.f32 %v671
  %vm678 = vmor %vm676, %vm677
  %v679 = vsel %vm678, %v671, %v675
  %v680 = vand.u32 2147483647, %v407
  %vm681 = vcmp.eq.f32.partialorder %v680, 8.507059e+37
  %v682 = vand.u32 %v407, 2147483648
  %v683 = vor.u32 1.1754944e-38, %v682
  %v684 = vsel %vm681, %v683, %v679
  %v685 = vmul.f32 1.0, %v684
  %v686 = vrcp.pop %v408
  %v687 = vmul.f32 %v408, %v686
  %v688 = vsub.f32 1.0, %v687
  %v689 = vmul.f32 %v686, %v688
  %v690 = vadd.f32 %v686, %v689
  %vm691 = vweird.f32 %v408
  %vm692 = vweird.f32 %v686
  %vm693 = vmor %vm691, %vm692
  %v694 = vsel %vm693, %v686, %v690
  %v695 = vand.u32 2147483647, %v408
  %vm696 = vcmp.eq.f32.partialorder %v695, 8.507059e+37
  %v697 = vand.u32 %v408, 2147483648
  %v698 = vor.u32 1.1754944e-38, %v697
  %v699 = vsel %vm696, %v698, %v694
  %v700 = vmul.f32 1.0, %v699
  %v701 = vrcp.pop %v409
  %v702 = vmul.f32 %v409, %v701
  %v703 = vsub.f32 1.0, %v702
  %v704 = vmul.f32 %v701, %v703
  %v705 = vadd.f32 %v701, %v704
  %vm706 = vweird.f32 %v409
  %vm707 = vweird.f32 %v701
  %vm708 = vmor %vm706, %vm707
  %v709 = vsel %vm708, %v701, %v705
  %v710 = vand.u32 2147483647, %v409
  %vm711 = vcmp.eq.f32.partialorder %v710, 8.507059e+37
  %v712 = vand.u32 %v409, 2147483648
  %v713 = vor.u32 1.1754944e-38, %v712
  %v714 = vsel %vm711, %v713, %v709
  %v715 = vmul.f32 1.0, %v714
  %v716 = vrcp.pop %v410
  %v717 = vmul.f32 %v410, %v716
  %v718 = vsub.f32 1.0, %v717
  %v719 = vmul.f32 %v716, %v718
  %v720 = vadd.f32 %v716, %v719
  %vm721 = vweird.f32 %v410
  %vm722 = vweird.f32 %v716
  %vm723 = vmor %vm721, %vm722
  %v724 = vsel %vm723, %v716, %v720
  %v725 = vand.u32 2147483647, %v410
  %vm726 = vcmp.eq.f32.partialorder %v725, 8.507059e+37
  %v727 = vand.u32 %v410, 2147483648
  %v728 = vor.u32 1.1754944e-38, %v727
  %v729 = vsel %vm726, %v728, %v724
  %v730 = vmul.f32 1.0, %v729
  %v731 = vrcp.pop %v411
  %v732 = vmul.f32 %v411, %v731
  %v733 = vsub.f32 1.0, %v732
  %v734 = vmul.f32 %v731, %v733
  %v735 = vadd.f32 %v731, %v734
  %vm736 = vweird.f32 %v411
  %vm737 = vweird.f32 %v731
  %vm738 = vmor %vm736, %vm737
  %v739 = vsel %vm738, %v731, %v735
  %v740 = vand.u32 2147483647, %v411
  %vm741 = vcmp.eq.f32.partialorder %v740, 8.507059e+37
  %v742 = vand.u32 %v411, 2147483648
  %v743 = vor.u32 1.1754944e-38, %v742
  %v744 = vsel %vm741, %v743, %v739
  %v745 = vmul.f32 1.0, %v744
  %v746 = vrcp.pop %v412
  %v747 = vmul.f32 %v412, %v746
  %v748 = vsub.f32 1.0, %v747
  %v749 = vmul.f32 %v746, %v748
  %v750 = vadd.f32 %v746, %v749
  %vm751 = vweird.f32 %v412
  %vm752 = vweird.f32 %v746
  %vm753 = vmor %vm751, %vm752
  %v754 = vsel %vm753, %v746, %v750
  %v755 = vand.u32 2147483647, %v412
  %vm756 = vcmp.eq.f32.partialorder %v755, 8.507059e+37
  %v757 = vand.u32 %v412, 2147483648
  %v758 = vor.u32 1.1754944e-38, %v757
  %v759 = vsel %vm756, %v758, %v754
  %v760 = vmul.f32 1.0, %v759
  %v761 = vrcp.pop %v413
  %v762 = vmul.f32 %v413, %v761
  %v763 = vsub.f32 1.0, %v762
  %v764 = vmul.f32 %v761, %v763
  %v765 = vadd.f32 %v761, %v764
  %vm766 = vweird.f32 %v413
  %vm767 = vweird.f32 %v761
  %vm768 = vmor %vm766, %vm767
  %v769 = vsel %vm768, %v761, %v765
  %v770 = vand.u32 2147483647, %v413
  %vm771 = vcmp.eq.f32.partialorder %v770, 8.507059e+37
  %v772 = vand.u32 %v413, 2147483648
  %v773 = vor.u32 1.1754944e-38, %v772
  %v774 = vsel %vm771, %v773, %v769
  %v775 = vmul.f32 1.0, %v774
  %v776 = vrcp.pop %v414
  %v777 = vmul.f32 %v414, %v776
  %v778 = vsub.f32 1.0, %v777
  %v779 = vmul.f32 %v776, %v778
  %v780 = vadd.f32 %v776, %v779
  %vm781 = vweird.f32 %v414
  %vm782 = vweird.f32 %v776
  %vm783 = vmor %vm781, %vm782
  %v784 = vsel %vm783, %v776, %v780
  %v785 = vand.u32 2147483647, %v414
  %vm786 = vcmp.eq.f32.partialorder %v785, 8.507059e+37
  %v787 = vand.u32 %v414, 2147483648
  %v788 = vor.u32 1.1754944e-38, %v787
  %v789 = vsel %vm786, %v788, %v784
  %v790 = vmul.f32 1.0, %v789
  %v791 = vrcp.pop %v415
  %v792 = vmul.f32 %v415, %v791
  %v793 = vsub.f32 1.0, %v792
  %v794 = vmul.f32 %v791, %v793
  %v795 = vadd.f32 %v791, %v794
  %vm796 = vweird.f32 %v415
  %vm797 = vweird.f32 %v791
  %vm798 = vmor %vm796, %vm797
  %v799 = vsel %vm798, %v791, %v795
  %v800 = vand.u32 2147483647, %v415
  %vm801 = vcmp.eq.f32.partialorder %v800, 8.507059e+37
  %v802 = vand.u32 %v415, 2147483648
  %v803 = vor.u32 1.1754944e-38, %v802
  %v804 = vsel %vm801, %v803, %v799
  %v805 = vmul.f32 1.0, %v804
  %v806 = vrcp.pop %v416
  %v807 = vmul.f32 %v416, %v806
  %v808 = vsub.f32 1.0, %v807
  %v809 = vmul.f32 %v806, %v808
  %v810 = vadd.f32 %v806, %v809
  %vm811 = vweird.f32 %v416
  %vm812 = vweird.f32 %v806
  %vm813 = vmor %vm811, %vm812
  %v814 = vsel %vm813, %v806, %v810
  %v815 = vand.u32 2147483647, %v416
  %vm816 = vcmp.eq.f32.partialorder %v815, 8.507059e+37
  %v817 = vand.u32 %v416, 2147483648
  %v818 = vor.u32 1.1754944e-38, %v817
  %v819 = vsel %vm816, %v818, %v814
  %v820 = vmul.f32 1.0, %v819
  %v821 = vrcp.pop %v417
  %v822 = vmul.f32 %v417, %v821
  %v823 = vsub.f32 1.0, %v822
  %v824 = vmul.f32 %v821, %v823
  %v825 = vadd.f32 %v821, %v824
  %vm826 = vweird.f32 %v417
  %vm827 = vweird.f32 %v821
  %vm828 = vmor %vm826, %vm827
  %v829 = vsel %vm828, %v821, %v825
  %v830 = vand.u32 2147483647, %v417
  %vm831 = vcmp.eq.f32.partialorder %v830, 8.507059e+37
  %v832 = vand.u32 %v417, 2147483648
  %v833 = vor.u32 1.1754944e-38, %v832
  %v834 = vsel %vm831, %v833, %v829
  %v835 = vmul.f32 1.0, %v834
  %v836 = vrcp.pop %v418
  %v837 = vmul.f32 %v418, %v836
  %v838 = vsub.f32 1.0, %v837
  %v839 = vmul.f32 %v836, %v838
  %v840 = vadd.f32 %v836, %v839
  %vm841 = vweird.f32 %v418
  %vm842 = vweird.f32 %v836
  %vm843 = vmor %vm841, %vm842
  %v844 = vsel %vm843, %v836, %v840
  %v845 = vand.u32 2147483647, %v418
  %vm846 = vcmp.eq.f32.partialorder %v845, 8.507059e+37
  %v847 = vand.u32 %v418, 2147483648
  %v848 = vor.u32 1.1754944e-38, %v847
  %v849 = vsel %vm846, %v848, %v844
  %v850 = vmul.f32 1.0, %v849
  %v851 = vrcp.pop %v419
  %v852 = vmul.f32 %v419, %v851
  %v853 = vsub.f32 1.0, %v852
  %v854 = vmul.f32 %v851, %v853
  %v855 = vadd.f32 %v851, %v854
  %vm856 = vweird.f32 %v419
  %vm857 = vweird.f32 %v851
  %vm858 = vmor %vm856, %vm857
  %v859 = vsel %vm858, %v851, %v855
  %v860 = vand.u32 2147483647, %v419
  %vm861 = vcmp.eq.f32.partialorder %v860, 8.507059e+37
  %v862 = vand.u32 %v419, 2147483648
  %v863 = vor.u32 1.1754944e-38, %v862
  %v864 = vsel %vm861, %v863, %v859
  %v865 = vmul.f32 1.0, %v864
  %v866 = vrcp.pop %v420
  %v867 = vmul.f32 %v420, %v866
  %v868 = vsub.f32 1.0, %v867
  %v869 = vmul.f32 %v866, %v868
  %v870 = vadd.f32 %v866, %v869
  %vm871 = vweird.f32 %v420
  %vm872 = vweird.f32 %v866
  %vm873 = vmor %vm871, %vm872
  %v874 = vsel %vm873, %v866, %v870
  %v875 = vand.u32 2147483647, %v420
  %vm876 = vcmp.eq.f32.partialorder %v875, 8.507059e+37
  %v877 = vand.u32 %v420, 2147483648
  %v878 = vor.u32 1.1754944e-38, %v877
  %v879 = vsel %vm876, %v878, %v874
  %v880 = vmul.f32 1.0, %v879
  %v881 = vrcp.pop %v421
  %v882 = vmul.f32 %v421, %v881
  %v883 = vsub.f32 1.0, %v882
  %v884 = vmul.f32 %v881, %v883
  %v885 = vadd.f32 %v881, %v884
  %vm886 = vweird.f32 %v421
  %vm887 = vweird.f32 %v881
  %vm888 = vmor %vm886, %vm887
  %v889 = vsel %vm888, %v881, %v885
  %v890 = vand.u32 2147483647, %v421
  %vm891 = vcmp.eq.f32.partialorder %v890, 8.507059e+37
  %v892 = vand.u32 %v421, 2147483648
  %v893 = vor.u32 1.1754944e-38, %v892
  %v894 = vsel %vm891, %v893, %v889
  %v895 = vmul.f32 1.0, %v894
  %v896 = vrcp.pop %v422
  %v897 = vmul.f32 %v422, %v896
  %v898 = vsub.f32 1.0, %v897
  %v899 = vmul.f32 %v896, %v898
  %v900 = vadd.f32 %v896, %v899
  %vm901 = vweird.f32 %v422
  %vm902 = vweird.f32 %v896
  %vm903 = vmor %vm901, %vm902
  %v904 = vsel %vm903, %v896, %v900
  %v905 = vand.u32 2147483647, %v422
  %vm906 = vcmp.eq.f32.partialorder %v905, 8.507059e+37
  %v907 = vand.u32 %v422, 2147483648
  %v908 = vor.u32 1.1754944e-38, %v907
  %v909 = vsel %vm906, %v908, %v904
  %v910 = vmul.f32 1.0, %v909
  %v911 = vrcp.pop %v423
  %v912 = vmul.f32 %v423, %v911
  %v913 = vsub.f32 1.0, %v912
  %v914 = vmul.f32 %v911, %v913
  %v915 = vadd.f32 %v911, %v914
  %vm916 = vweird.f32 %v423
  %vm917 = vweird.f32 %v911
  %vm918 = vmor %vm916, %vm917
  %v919 = vsel %vm918, %v911, %v915
  %v920 = vand.u32 2147483647, %v423
  %vm921 = vcmp.eq.f32.partialorder %v920, 8.507059e+37
  %v922 = vand.u32 %v423, 2147483648
  %v923 = vor.u32 1.1754944e-38, %v922
  %v924 = vsel %vm921, %v923, %v919
  %v925 = vmul.f32 1.0, %v924
  %v926 = vrcp.pop %v424
  %v927 = vmul.f32 %v424, %v926
  %v928 = vsub.f32 1.0, %v927
  %v929 = vmul.f32 %v926, %v928
  %v930 = vadd.f32 %v926, %v929
  %vm931 = vweird.f32 %v424
  %vm932 = vweird.f32 %v926
  %vm933 = vmor %vm931, %vm932
  %v934 = vsel %vm933, %v926, %v930
  %v935 = vand.u32 2147483647, %v424
  %vm936 = vcmp.eq.f32.partialorder %v935, 8.507059e+37
  %v937 = vand.u32 %v424, 2147483648
  %v938 = vor.u32 1.1754944e-38, %v937
  %v939 = vsel %vm936, %v938, %v934
  %v940 = vmul.f32 1.0, %v939
  %v941 = vrcp.pop %v425
  %v942 = vmul.f32 %v425, %v941
  %v943 = vsub.f32 1.0, %v942
  %v944 = vmul.f32 %v941, %v943
  %v945 = vadd.f32 %v941, %v944
  %vm946 = vweird.f32 %v425
  %vm947 = vweird.f32 %v941
  %vm948 = vmor %vm946, %vm947
  %v949 = vsel %vm948, %v941, %v945
  %v950 = vand.u32 2147483647, %v425
  %vm951 = vcmp.eq.f32.partialorder %v950, 8.507059e+37
  %v952 = vand.u32 %v425, 2147483648
  %v953 = vor.u32 1.1754944e-38, %v952
  %v954 = vsel %vm951, %v953, %v949
  %v955 = vmul.f32 1.0, %v954
  %v956 = vrcp.pop %v426
  %v957 = vmul.f32 %v426, %v956
  %v958 = vsub.f32 1.0, %v957
  %v959 = vmul.f32 %v956, %v958
  %v960 = vadd.f32 %v956, %v959
  %vm961 = vweird.f32 %v426
  %vm962 = vweird.f32 %v956
  %vm963 = vmor %vm961, %vm962
  %v964 = vsel %vm963, %v956, %v960
  %v965 = vand.u32 2147483647, %v426
  %vm966 = vcmp.eq.f32.partialorder %v965, 8.507059e+37
  %v967 = vand.u32 %v426, 2147483648
  %v968 = vor.u32 1.1754944e-38, %v967
  %v969 = vsel %vm966, %v968, %v964
  %v970 = vmul.f32 1.0, %v969
  %v971 = vrcp.pop %v427
  %v972 = vmul.f32 %v427, %v971
  %v973 = vsub.f32 1.0, %v972
  %v974 = vmul.f32 %v971, %v973
  %v975 = vadd.f32 %v971, %v974
  %vm976 = vweird.f32 %v427
  %vm977 = vweird.f32 %v971
  %vm978 = vmor %vm976, %vm977
  %v979 = vsel %vm978, %v971, %v975
  %v980 = vand.u32 2147483647, %v427
  %vm981 = vcmp.eq.f32.partialorder %v980, 8.507059e+37
  %v982 = vand.u32 %v427, 2147483648
  %v983 = vor.u32 1.1754944e-38, %v982
  %v984 = vsel %vm981, %v983, %v979
  %v985 = vmul.f32 1.0, %v984
  %v986 = vrcp.pop %v428
  %v987 = vmul.f32 %v428, %v986
  %v988 = vsub.f32 1.0, %v987
  %v989 = vmul.f32 %v986, %v988
  %v990 = vadd.f32 %v986, %v989
  %vm991 = vweird.f32 %v428
  %vm992 = vweird.f32 %v986
  %vm993 = vmor %vm991, %vm992
  %v994 = vsel %vm993, %v986, %v990
  %v995 = vand.u32 2147483647, %v428
  %vm996 = vcmp.eq.f32.partialorder %v995, 8.507059e+37
  %v997 = vand.u32 %v428, 2147483648
  %v998 = vor.u32 1.1754944e-38, %v997
  %v999 = vsel %vm996, %v998, %v994
  %v1000 = vmul.f32 1.0, %v999
  %v1001 = vrcp.pop %v429
  %v1002 = vmul.f32 %v429, %v1001
  %v1003 = vsub.f32 1.0, %v1002
  %v1004 = vmul.f32 %v1001, %v1003
  %v1005 = vadd.f32 %v1001, %v1004
  %vm1006 = vweird.f32 %v429
  %vm1007 = vweird.f32 %v1001
  %vm1008 = vmor %vm1006, %vm1007
  %v1009 = vsel %vm1008, %v1001, %v1005
  %v1010 = vand.u32 2147483647, %v429
  %vm1011 = vcmp.eq.f32.partialorder %v1010, 8.507059e+37
  %v1012 = vand.u32 %v429, 2147483648
  %v1013 = vor.u32 1.1754944e-38, %v1012
  %v1014 = vsel %vm1011, %v1013, %v1009
  %v1015 = vmul.f32 1.0, %v1014
  %v1016 = vrcp.pop %v430
  %v1017 = vmul.f32 %v430, %v1016
  %v1018 = vsub.f32 1.0, %v1017
  %v1019 = vmul.f32 %v1016, %v1018
  %v1020 = vadd.f32 %v1016, %v1019
  %vm1021 = vweird.f32 %v430
  %vm1022 = vweird.f32 %v1016
  %vm1023 = vmor %vm1021, %vm1022
  %v1024 = vsel %vm1023, %v1016, %v1020
  %v1025 = vand.u32 2147483647, %v430
  %vm1026 = vcmp.eq.f32.partialorder %v1025, 8.507059e+37
  %v1027 = vand.u32 %v430, 2147483648
  %v1028 = vor.u32 1.1754944e-38, %v1027
  %v1029 = vsel %vm1026, %v1028, %v1024
  %v1030 = vmul.f32 1.0, %v1029
  %v1031 = vrcp.pop %v431
  %v1032 = vmul.f32 %v431, %v1031
  %v1033 = vsub.f32 1.0, %v1032
  %v1034 = vmul.f32 %v1031, %v1033
  %v1035 = vadd.f32 %v1031, %v1034
  %vm1036 = vweird.f32 %v431
  %vm1037 = vweird.f32 %v1031
  %vm1038 = vmor %vm1036, %vm1037
  %v1039 = vsel %vm1038, %v1031, %v1035
  %v1040 = vand.u32 2147483647, %v431
  %vm1041 = vcmp.eq.f32.partialorder %v1040, 8.507059e+37
  %v1042 = vand.u32 %v431, 2147483648
  %v1043 = vor.u32 1.1754944e-38, %v1042
  %v1044 = vsel %vm1041, %v1043, %v1039
  %v1045 = vmul.f32 1.0, %v1044
  %v1046 = vrcp.pop %v432
  %v1047 = vmul.f32 %v432, %v1046
  %v1048 = vsub.f32 1.0, %v1047
  %v1049 = vmul.f32 %v1046, %v1048
  %v1050 = vadd.f32 %v1046, %v1049
  %vm1051 = vweird.f32 %v432
  %vm1052 = vweird.f32 %v1046
  %vm1053 = vmor %vm1051, %vm1052
  %v1054 = vsel %vm1053, %v1046, %v1050
  %v1055 = vand.u32 2147483647, %v432
  %vm1056 = vcmp.eq.f32.partialorder %v1055, 8.507059e+37
  %v1057 = vand.u32 %v432, 2147483648
  %v1058 = vor.u32 1.1754944e-38, %v1057
  %v1059 = vsel %vm1056, %v1058, %v1054
  %v1060 = vmul.f32 1.0, %v1059
  %v1061 = vrcp.pop %v433
  %v1062 = vmul.f32 %v433, %v1061
  %v1063 = vsub.f32 1.0, %v1062
  %v1064 = vmul.f32 %v1061, %v1063
  %v1065 = vadd.f32 %v1061, %v1064
  %vm1066 = vweird.f32 %v433
  %vm1067 = vweird.f32 %v1061
  %vm1068 = vmor %vm1066, %vm1067
  %v1069 = vsel %vm1068, %v1061, %v1065
  %v1070 = vand.u32 2147483647, %v433
  %vm1071 = vcmp.eq.f32.partialorder %v1070, 8.507059e+37
  %v1072 = vand.u32 %v433, 2147483648
  %v1073 = vor.u32 1.1754944e-38, %v1072
  %v1074 = vsel %vm1071, %v1073, %v1069
  %v1075 = vmul.f32 1.0, %v1074
  %v1076 = vrcp.pop %v434
  %v1077 = vmul.f32 %v434, %v1076
  %v1078 = vsub.f32 1.0, %v1077
  %v1079 = vmul.f32 %v1076, %v1078
  %v1080 = vadd.f32 %v1076, %v1079
  %vm1081 = vweird.f32 %v434
  %vm1082 = vweird.f32 %v1076
  %vm1083 = vmor %vm1081, %vm1082
  %v1084 = vsel %vm1083, %v1076, %v1080
  %v1085 = vand.u32 2147483647, %v434
  %vm1086 = vcmp.eq.f32.partialorder %v1085, 8.507059e+37
  %v1087 = vand.u32 %v434, 2147483648
  %v1088 = vor.u32 1.1754944e-38, %v1087
  %v1089 = vsel %vm1086, %v1088, %v1084
  %v1090 = vmul.f32 1.0, %v1089
  %v1091 = vrcp.pop %v435
  %v1092 = vmul.f32 %v435, %v1091
  %v1093 = vsub.f32 1.0, %v1092
  %v1094 = vmul.f32 %v1091, %v1093
  %v1095 = vadd.f32 %v1091, %v1094
  %vm1096 = vweird.f32 %v435
  %vm1097 = vweird.f32 %v1091
  %vm1098 = vmor %vm1096, %vm1097
  %v1099 = vsel %vm1098, %v1091, %v1095
  %v1100 = vand.u32 2147483647, %v435
  %vm1101 = vcmp.eq.f32.partialorder %v1100, 8.507059e+37
  %v1102 = vand.u32 %v435, 2147483648
  %v1103 = vor.u32 1.1754944e-38, %v1102
  %v1104 = vsel %vm1101, %v1103, %v1099
  %v1105 = vmul.f32 1.0, %v1104
  %v1106 = vrcp.pop %v436
  %v1107 = vmul.f32 %v436, %v1106
  %v1108 = vsub.f32 1.0, %v1107
  %v1109 = vmul.f32 %v1106, %v1108
  %v1110 = vadd.f32 %v1106, %v1109
  %vm1111 = vweird.f32 %v436
  %vm1112 = vweird.f32 %v1106
  %vm1113 = vmor %vm1111, %vm1112
  %v1114 = vsel %vm1113, %v1106, %v1110
  %v1115 = vand.u32 2147483647, %v436
  %vm1116 = vcmp.eq.f32.partialorder %v1115, 8.507059e+37
  %v1117 = vand.u32 %v436, 2147483648
  %v1118 = vor.u32 1.1754944e-38, %v1117
  %v1119 = vsel %vm1116, %v1118, %v1114
  %v1120 = vmul.f32 1.0, %v1119
  %v1121 = vrcp.pop %v437
  %v1122 = vmul.f32 %v437, %v1121
  %v1123 = vsub.f32 1.0, %v1122
  %v1124 = vmul.f32 %v1121, %v1123
  %v1125 = vadd.f32 %v1121, %v1124
  %vm1126 = vweird.f32 %v437
  %vm1127 = vweird.f32 %v1121
  %vm1128 = vmor %vm1126, %vm1127
  %v1129 = vsel %vm1128, %v1121, %v1125
  %v1130 = vand.u32 2147483647, %v437
  %vm1131 = vcmp.eq.f32.partialorder %v1130, 8.507059e+37
  %v1132 = vand.u32 %v437, 2147483648
  %v1133 = vor.u32 1.1754944e-38, %v1132
  %v1134 = vsel %vm1131, %v1133, %v1129
  %v1135 = vmul.f32 1.0, %v1134
  %v1136 = vrcp.pop %v438
  %v1137 = vmul.f32 %v438, %v1136
  %v1138 = vsub.f32 1.0, %v1137
  %v1139 = vmul.f32 %v1136, %v1138
  %v1140 = vadd.f32 %v1136, %v1139
  %vm1141 = vweird.f32 %v438
  %vm1142 = vweird.f32 %v1136
  %vm1143 = vmor %vm1141, %vm1142
  %v1144 = vsel %vm1143, %v1136, %v1140
  %v1145 = vand.u32 2147483647, %v438
  %vm1146 = vcmp.eq.f32.partialorder %v1145, 8.507059e+37
  %v1147 = vand.u32 %v438, 2147483648
  %v1148 = vor.u32 1.1754944e-38, %v1147
  %v1149 = vsel %vm1146, %v1148, %v1144
  %v1150 = vmul.f32 1.0, %v1149
  %v1151 = vrcp.pop %v439
  %v1152 = vmul.f32 %v439, %v1151
  %v1153 = vsub.f32 1.0, %v1152
  %v1154 = vmul.f32 %v1151, %v1153
  %v1155 = vadd.f32 %v1151, %v1154
  %vm1156 = vweird.f32 %v439
  %vm1157 = vweird.f32 %v1151
  %vm1158 = vmor %vm1156, %vm1157
  %v1159 = vsel %vm1158, %v1151, %v1155
  %v1160 = vand.u32 2147483647, %v439
  %vm1161 = vcmp.eq.f32.partialorder %v1160, 8.507059e+37
  %v1162 = vand.u32 %v439, 2147483648
  %v1163 = vor.u32 1.1754944e-38, %v1162
  %v1164 = vsel %vm1161, %v1163, %v1159
  %v1165 = vmul.f32 1.0, %v1164
  %v1166 = vrcp.pop %v440
  %v1167 = vmul.f32 %v440, %v1166
  %v1168 = vsub.f32 1.0, %v1167
  %v1169 = vmul.f32 %v1166, %v1168
  %v1170 = vadd.f32 %v1166, %v1169
  %vm1171 = vweird.f32 %v440
  %vm1172 = vweird.f32 %v1166
  %vm1173 = vmor %vm1171, %vm1172
  %v1174 = vsel %vm1173, %v1166, %v1170
  %v1175 = vand.u32 2147483647, %v440
  %vm1176 = vcmp.eq.f32.partialorder %v1175, 8.507059e+37
  %v1177 = vand.u32 %v440, 2147483648
  %v1178 = vor.u32 1.1754944e-38, %v1177
  %v1179 = vsel %vm1176, %v1178, %v1174
  %v1180 = vmul.f32 1.0, %v1179
  %v1181 = vrcp.pop %v441
  %v1182 = vmul.f32 %v441, %v1181
  %v1183 = vsub.f32 1.0, %v1182
  %v1184 = vmul.f32 %v1181, %v1183
  %v1185 = vadd.f32 %v1181, %v1184
  %vm1186 = vweird.f32 %v441
  %vm1187 = vweird.f32 %v1181
  %vm1188 = vmor %vm1186, %vm1187
  %v1189 = vsel %vm1188, %v1181, %v1185
  %v1190 = vand.u32 2147483647, %v441
  %vm1191 = vcmp.eq.f32.partialorder %v1190, 8.507059e+37
  %v1192 = vand.u32 %v441, 2147483648
  %v1193 = vor.u32 1.1754944e-38, %v1192
  %v1194 = vsel %vm1191, %v1193, %v1189
  %v1195 = vmul.f32 1.0, %v1194
  %v1196 = vrcp.pop %v442
  %v1197 = vmul.f32 %v442, %v1196
  %v1198 = vsub.f32 1.0, %v1197
  %v1199 = vmul.f32 %v1196, %v1198
  %v1200 = vadd.f32 %v1196, %v1199
  %vm1201 = vweird.f32 %v442
  %vm1202 = vweird.f32 %v1196
  %vm1203 = vmor %vm1201, %vm1202
  %v1204 = vsel %vm1203, %v1196, %v1200
  %v1205 = vand.u32 2147483647, %v442
  %vm1206 = vcmp.eq.f32.partialorder %v1205, 8.507059e+37
  %v1207 = vand.u32 %v442, 2147483648
  %v1208 = vor.u32 1.1754944e-38, %v1207
  %v1209 = vsel %vm1206, %v1208, %v1204
  %v1210 = vmul.f32 1.0, %v1209
  %v1211 = vrcp.pop %v443
  %v1212 = vmul.f32 %v443, %v1211
  %v1213 = vsub.f32 1.0, %v1212
  %v1214 = vmul.f32 %v1211, %v1213
  %v1215 = vadd.f32 %v1211, %v1214
  %vm1216 = vweird.f32 %v443
  %vm1217 = vweird.f32 %v1211
  %vm1218 = vmor %vm1216, %vm1217
  %v1219 = vsel %vm1218, %v1211, %v1215
  %v1220 = vand.u32 2147483647, %v443
  %vm1221 = vcmp.eq.f32.partialorder %v1220, 8.507059e+37
  %v1222 = vand.u32 %v443, 2147483648
  %v1223 = vor.u32 1.1754944e-38, %v1222
  %v1224 = vsel %vm1221, %v1223, %v1219
  %v1225 = vmul.f32 1.0, %v1224
  %v1226 = vrcp.pop %v444
  %v1227 = vmul.f32 %v444, %v1226
  %v1228 = vsub.f32 1.0, %v1227
  %v1229 = vmul.f32 %v1226, %v1228
  %v1230 = vadd.f32 %v1226, %v1229
  %vm1231 = vweird.f32 %v444
  %vm1232 = vweird.f32 %v1226
  %vm1233 = vmor %vm1231, %vm1232
  %v1234 = vsel %vm1233, %v1226, %v1230
  %v1235 = vand.u32 2147483647, %v444
  %vm1236 = vcmp.eq.f32.partialorder %v1235, 8.507059e+37
  %v1237 = vand.u32 %v444, 2147483648
  %v1238 = vor.u32 1.1754944e-38, %v1237
  %v1239 = vsel %vm1236, %v1238, %v1234
  %v1240 = vmul.f32 1.0, %v1239
  %v1241 = vrcp.pop %v445
  %v1242 = vmul.f32 %v445, %v1241
  %v1243 = vsub.f32 1.0, %v1242
  %v1244 = vmul.f32 %v1241, %v1243
  %v1245 = vadd.f32 %v1241, %v1244
  %vm1246 = vweird.f32 %v445
  %vm1247 = vweird.f32 %v1241
  %vm1248 = vmor %vm1246, %vm1247
  %v1249 = vsel %vm1248, %v1241, %v1245
  %v1250 = vand.u32 2147483647, %v445
  %vm1251 = vcmp.eq.f32.partialorder %v1250, 8.507059e+37
  %v1252 = vand.u32 %v445, 2147483648
  %v1253 = vor.u32 1.1754944e-38, %v1252
  %v1254 = vsel %vm1251, %v1253, %v1249
  %v1255 = vmul.f32 1.0, %v1254
  %v1256 = vrcp.pop %v446
  %v1257 = vmul.f32 %v446, %v1256
  %v1258 = vsub.f32 1.0, %v1257
  %v1259 = vmul.f32 %v1256, %v1258
  %v1260 = vadd.f32 %v1256, %v1259
  %vm1261 = vweird.f32 %v446
  %vm1262 = vweird.f32 %v1256
  %vm1263 = vmor %vm1261, %vm1262
  %v1264 = vsel %vm1263, %v1256, %v1260
  %v1265 = vand.u32 2147483647, %v446
  %vm1266 = vcmp.eq.f32.partialorder %v1265, 8.507059e+37
  %v1267 = vand.u32 %v446, 2147483648
  %v1268 = vor.u32 1.1754944e-38, %v1267
  %v1269 = vsel %vm1266, %v1268, %v1264
  %v1270 = vmul.f32 1.0, %v1269
  %v1271 = vrcp.pop %v447
  %v1272 = vmul.f32 %v447, %v1271
  %v1273 = vsub.f32 1.0, %v1272
  %v1274 = vmul.f32 %v1271, %v1273
  %v1275 = vadd.f32 %v1271, %v1274
  %vm1276 = vweird.f32 %v447
  %vm1277 = vweird.f32 %v1271
  %vm1278 = vmor %vm1276, %vm1277
  %v1279 = vsel %vm1278, %v1271, %v1275
  %v1280 = vand.u32 2147483647, %v447
  %vm1281 = vcmp.eq.f32.partialorder %v1280, 8.507059e+37
  %v1282 = vand.u32 %v447, 2147483648
  %v1283 = vor.u32 1.1754944e-38, %v1282
  %v1284 = vsel %vm1281, %v1283, %v1279
  %v1285 = vmul.f32 1.0, %v1284
  %v1286 = vrcp.pop %v448
  %v1287 = vmul.f32 %v448, %v1286
  %v1288 = vsub.f32 1.0, %v1287
  %v1289 = vmul.f32 %v1286, %v1288
  %v1290 = vadd.f32 %v1286, %v1289
  %vm1291 = vweird.f32 %v448
  %vm1292 = vweird.f32 %v1286
  %vm1293 = vmor %vm1291, %vm1292
  %v1294 = vsel %vm1293, %v1286, %v1290
  %v1295 = vand.u32 2147483647, %v448
  %vm1296 = vcmp.eq.f32.partialorder %v1295, 8.507059e+37
  %v1297 = vand.u32 %v448, 2147483648
  %v1298 = vor.u32 1.1754944e-38, %v1297
  %v1299 = vsel %vm1296, %v1298, %v1294
  %v1300 = vmul.f32 1.0, %v1299
  %v1301 = vrcp.pop %v449
  %v1302 = vmul.f32 %v449, %v1301
  %v1303 = vsub.f32 1.0, %v1302
  %v1304 = vmul.f32 %v1301, %v1303
  %v1305 = vadd.f32 %v1301, %v1304
  %vm1306 = vweird.f32 %v449
  %vm1307 = vweird.f32 %v1301
  %vm1308 = vmor %vm1306, %vm1307
  %v1309 = vsel %vm1308, %v1301, %v1305
  %v1310 = vand.u32 2147483647, %v449
  %vm1311 = vcmp.eq.f32.partialorder %v1310, 8.507059e+37
  %v1312 = vand.u32 %v449, 2147483648
  %v1313 = vor.u32 1.1754944e-38, %v1312
  %v1314 = vsel %vm1311, %v1313, %v1309
  %v1315 = vmul.f32 1.0, %v1314
  %v1316 = vrcp.pop %v450
  %v1317 = vmul.f32 %v450, %v1316
  %v1318 = vsub.f32 1.0, %v1317
  %v1319 = vmul.f32 %v1316, %v1318
  %v1320 = vadd.f32 %v1316, %v1319
  %vm1321 = vweird.f32 %v450
  %vm1322 = vweird.f32 %v1316
  %vm1323 = vmor %vm1321, %vm1322
  %v1324 = vsel %vm1323, %v1316, %v1320
  %v1325 = vand.u32 2147483647, %v450
  %vm1326 = vcmp.eq.f32.partialorder %v1325, 8.507059e+37
  %v1327 = vand.u32 %v450, 2147483648
  %v1328 = vor.u32 1.1754944e-38, %v1327
  %v1329 = vsel %vm1326, %v1328, %v1324
  %v1330 = vmul.f32 1.0, %v1329
  %v1331 = vrcp.pop %v451
  %v1332 = vmul.f32 %v451, %v1331
  %v1333 = vsub.f32 1.0, %v1332
  %v1334 = vmul.f32 %v1331, %v1333
  %v1335 = vadd.f32 %v1331, %v1334
  %vm1336 = vweird.f32 %v451
  %vm1337 = vweird.f32 %v1331
  %vm1338 = vmor %vm1336, %vm1337
  %v1339 = vsel %vm1338, %v1331, %v1335
  %v1340 = vand.u32 2147483647, %v451
  %vm1341 = vcmp.eq.f32.partialorder %v1340, 8.507059e+37
  %v1342 = vand.u32 %v451, 2147483648
  %v1343 = vor.u32 1.1754944e-38, %v1342
  %v1344 = vsel %vm1341, %v1343, %v1339
  %v1345 = vmul.f32 1.0, %v1344
  %v1346 = vrcp.pop %v452
  %v1347 = vmul.f32 %v452, %v1346
  %v1348 = vsub.f32 1.0, %v1347
  %v1349 = vmul.f32 %v1346, %v1348
  %v1350 = vadd.f32 %v1346, %v1349
  %vm1351 = vweird.f32 %v452
  %vm1352 = vweird.f32 %v1346
  %vm1353 = vmor %vm1351, %vm1352
  %v1354 = vsel %vm1353, %v1346, %v1350
  %v1355 = vand.u32 2147483647, %v452
  %vm1356 = vcmp.eq.f32.partialorder %v1355, 8.507059e+37
  %v1357 = vand.u32 %v452, 2147483648
  %v1358 = vor.u32 1.1754944e-38, %v1357
  %v1359 = vsel %vm1356, %v1358, %v1354
  %v1360 = vmul.f32 1.0, %v1359
  %v1361 = vrcp.pop %v453
  %v1362 = vmul.f32 %v453, %v1361
  %v1363 = vsub.f32 1.0, %v1362
  %v1364 = vmul.f32 %v1361, %v1363
  %v1365 = vadd.f32 %v1361, %v1364
  %vm1366 = vweird.f32 %v453
  %vm1367 = vweird.f32 %v1361
  %vm1368 = vmor %vm1366, %vm1367
  %v1369 = vsel %vm1368, %v1361, %v1365
  %v1370 = vand.u32 2147483647, %v453
  %vm1371 = vcmp.eq.f32.partialorder %v1370, 8.507059e+37
  %v1372 = vand.u32 %v453, 2147483648
  %v1373 = vor.u32 1.1754944e-38, %v1372
  %v1374 = vsel %vm1371, %v1373, %v1369
  %v1375 = vmul.f32 1.0, %v1374
  %v1376 = vrcp.pop %v454
  %v1377 = vmul.f32 %v454, %v1376
  %v1378 = vsub.f32 1.0, %v1377
  %v1379 = vmul.f32 %v1376, %v1378
  %v1380 = vadd.f32 %v1376, %v1379
  %vm1381 = vweird.f32 %v454
  %vm1382 = vweird.f32 %v1376
  %vm1383 = vmor %vm1381, %vm1382
  %v1384 = vsel %vm1383, %v1376, %v1380
  %v1385 = vand.u32 2147483647, %v454
  %vm1386 = vcmp.eq.f32.partialorder %v1385, 8.507059e+37
  %v1387 = vand.u32 %v454, 2147483648
  %v1388 = vor.u32 1.1754944e-38, %v1387
  %v1389 = vsel %vm1386, %v1388, %v1384
  %v1390 = vmul.f32 1.0, %v1389
  %v1391 = vrcp.pop %v455
  %v1392 = vmul.f32 %v455, %v1391
  %v1393 = vsub.f32 1.0, %v1392
  %v1394 = vmul.f32 %v1391, %v1393
  %v1395 = vadd.f32 %v1391, %v1394
  %vm1396 = vweird.f32 %v455
  %vm1397 = vweird.f32 %v1391
  %vm1398 = vmor %vm1396, %vm1397
  %v1399 = vsel %vm1398, %v1391, %v1395
  %v1400 = vand.u32 2147483647, %v455
  %vm1401 = vcmp.eq.f32.partialorder %v1400, 8.507059e+37
  %v1402 = vand.u32 %v455, 2147483648
  %v1403 = vor.u32 1.1754944e-38, %v1402
  %v1404 = vsel %vm1401, %v1403, %v1399
  %v1405 = vmul.f32 1.0, %v1404
  %v1406 = vrcp.pop %v456
  %v1407 = vmul.f32 %v456, %v1406
  %v1408 = vsub.f32 1.0, %v1407
  %v1409 = vmul.f32 %v1406, %v1408
  %v1410 = vadd.f32 %v1406, %v1409
  %vm1411 = vweird.f32 %v456
  %vm1412 = vweird.f32 %v1406
  %vm1413 = vmor %vm1411, %vm1412
  %v1414 = vsel %vm1413, %v1406, %v1410
  %v1415 = vand.u32 2147483647, %v456
  %vm1416 = vcmp.eq.f32.partialorder %v1415, 8.507059e+37
  %v1417 = vand.u32 %v456, 2147483648
  %v1418 = vor.u32 1.1754944e-38, %v1417
  %v1419 = vsel %vm1416, %v1418, %v1414
  %v1420 = vmul.f32 1.0, %v1419
  %v1421 = vrcp.pop %v457
  %v1422 = vmul.f32 %v457, %v1421
  %v1423 = vsub.f32 1.0, %v1422
  %v1424 = vmul.f32 %v1421, %v1423
  %v1425 = vadd.f32 %v1421, %v1424
  %vm1426 = vweird.f32 %v457
  %vm1427 = vweird.f32 %v1421
  %vm1428 = vmor %vm1426, %vm1427
  %v1429 = vsel %vm1428, %v1421, %v1425
  %v1430 = vand.u32 2147483647, %v457
  %vm1431 = vcmp.eq.f32.partialorder %v1430, 8.507059e+37
  %v1432 = vand.u32 %v457, 2147483648
  %v1433 = vor.u32 1.1754944e-38, %v1432
  %v1434 = vsel %vm1431, %v1433, %v1429
  %v1435 = vmul.f32 1.0, %v1434
  %v1436 = vrcp.pop %v458
  %v1437 = vmul.f32 %v458, %v1436
  %v1438 = vsub.f32 1.0, %v1437
  %v1439 = vmul.f32 %v1436, %v1438
  %v1440 = vadd.f32 %v1436, %v1439
  %vm1441 = vweird.f32 %v458
  %vm1442 = vweird.f32 %v1436
  %vm1443 = vmor %vm1441, %vm1442
  %v1444 = vsel %vm1443, %v1436, %v1440
  %v1445 = vand.u32 2147483647, %v458
  %vm1446 = vcmp.eq.f32.partialorder %v1445, 8.507059e+37
  %v1447 = vand.u32 %v458, 2147483648
  %v1448 = vor.u32 1.1754944e-38, %v1447
  %v1449 = vsel %vm1446, %v1448, %v1444
  %v1450 = vmul.f32 1.0, %v1449
  %v1451 = vrcp.pop %v459
  %v1452 = vmul.f32 %v459, %v1451
  %v1453 = vsub.f32 1.0, %v1452
  %v1454 = vmul.f32 %v1451, %v1453
  %v1455 = vadd.f32 %v1451, %v1454
  %vm1456 = vweird.f32 %v459
  %vm1457 = vweird.f32 %v1451
  %vm1458 = vmor %vm1456, %vm1457
  %v1459 = vsel %vm1458, %v1451, %v1455
  %v1460 = vand.u32 2147483647, %v459
  %vm1461 = vcmp.eq.f32.partialorder %v1460, 8.507059e+37
  %v1462 = vand.u32 %v459, 2147483648
  %v1463 = vor.u32 1.1754944e-38, %v1462
  %v1464 = vsel %vm1461, %v1463, %v1459
  %v1465 = vmul.f32 1.0, %v1464
  %v1466 = vrcp.pop %v460
  %v1467 = vmul.f32 %v460, %v1466
  %v1468 = vsub.f32 1.0, %v1467
  %v1469 = vmul.f32 %v1466, %v1468
  %v1470 = vadd.f32 %v1466, %v1469
  %vm1471 = vweird.f32 %v460
  %vm1472 = vweird.f32 %v1466
  %vm1473 = vmor %vm1471, %vm1472
  %v1474 = vsel %vm1473, %v1466, %v1470
  %v1475 = vand.u32 2147483647, %v460
  %vm1476 = vcmp.eq.f32.partialorder %v1475, 8.507059e+37
  %v1477 = vand.u32 %v460, 2147483648
  %v1478 = vor.u32 1.1754944e-38, %v1477
  %v1479 = vsel %vm1476, %v1478, %v1474
  %v1480 = vmul.f32 1.0, %v1479
  %v1481 = vrcp.pop %v461
  %v1482 = vmul.f32 %v461, %v1481
  %v1483 = vsub.f32 1.0, %v1482
  %v1484 = vmul.f32 %v1481, %v1483
  %v1485 = vadd.f32 %v1481, %v1484
  %vm1486 = vweird.f32 %v461
  %vm1487 = vweird.f32 %v1481
  %vm1488 = vmor %vm1486, %vm1487
  %v1489 = vsel %vm1488, %v1481, %v1485
  %v1490 = vand.u32 2147483647, %v461
  %vm1491 = vcmp.eq.f32.partialorder %v1490, 8.507059e+37
  %v1492 = vand.u32 %v461, 2147483648
  %v1493 = vor.u32 1.1754944e-38, %v1492
  %v1494 = vsel %vm1491, %v1493, %v1489
  %v1495 = vmul.f32 1.0, %v1494
  %v1496 = vrcp.pop %v462
  %v1497 = vmul.f32 %v462, %v1496
  %v1498 = vsub.f32 1.0, %v1497
  %v1499 = vmul.f32 %v1496, %v1498
  %v1500 = vadd.f32 %v1496, %v1499
  %vm1501 = vweird.f32 %v462
  %vm1502 = vweird.f32 %v1496
  %vm1503 = vmor %vm1501, %vm1502
  %v1504 = vsel %vm1503, %v1496, %v1500
  %v1505 = vand.u32 2147483647, %v462
  %vm1506 = vcmp.eq.f32.partialorder %v1505, 8.507059e+37
  %v1507 = vand.u32 %v462, 2147483648
  %v1508 = vor.u32 1.1754944e-38, %v1507
  %v1509 = vsel %vm1506, %v1508, %v1504
  %v1510 = vmul.f32 1.0, %v1509
  %v1511 = vrcp.pop %v463
  %v1512 = vmul.f32 %v463, %v1511
  %v1513 = vsub.f32 1.0, %v1512
  %v1514 = vmul.f32 %v1511, %v1513
  %v1515 = vadd.f32 %v1511, %v1514
  %vm1516 = vweird.f32 %v463
  %vm1517 = vweird.f32 %v1511
  %vm1518 = vmor %vm1516, %vm1517
  %v1519 = vsel %vm1518, %v1511, %v1515
  %v1520 = vand.u32 2147483647, %v463
  %vm1521 = vcmp.eq.f32.partialorder %v1520, 8.507059e+37
  %v1522 = vand.u32 %v463, 2147483648
  %v1523 = vor.u32 1.1754944e-38, %v1522
  %v1524 = vsel %vm1521, %v1523, %v1519
  %v1525 = vmul.f32 1.0, %v1524
  %v1526 = vrcp.pop %v464
  %v1527 = vmul.f32 %v464, %v1526
  %v1528 = vsub.f32 1.0, %v1527
  %v1529 = vmul.f32 %v1526, %v1528
  %v1530 = vadd.f32 %v1526, %v1529
  %vm1531 = vweird.f32 %v464
  %vm1532 = vweird.f32 %v1526
  %vm1533 = vmor %vm1531, %vm1532
  %v1534 = vsel %vm1533, %v1526, %v1530
  %v1535 = vand.u32 2147483647, %v464
  %vm1536 = vcmp.eq.f32.partialorder %v1535, 8.507059e+37
  %v1537 = vand.u32 %v464, 2147483648
  %v1538 = vor.u32 1.1754944e-38, %v1537
  %v1539 = vsel %vm1536, %v1538, %v1534
  %v1540 = vmul.f32 1.0, %v1539
  %v1541 = vrcp.pop %v465
  %v1542 = vmul.f32 %v465, %v1541
  %v1543 = vsub.f32 1.0, %v1542
  %v1544 = vmul.f32 %v1541, %v1543
  %v1545 = vadd.f32 %v1541, %v1544
  %vm1546 = vweird.f32 %v465
  %vm1547 = vweird.f32 %v1541
  %vm1548 = vmor %vm1546, %vm1547
  %v1549 = vsel %vm1548, %v1541, %v1545
  %v1550 = vand.u32 2147483647, %v465
  %vm1551 = vcmp.eq.f32.partialorder %v1550, 8.507059e+37
  %v1552 = vand.u32 %v465, 2147483648
  %v1553 = vor.u32 1.1754944e-38, %v1552
  %v1554 = vsel %vm1551, %v1553, %v1549
  %v1555 = vmul.f32 1.0, %v1554
  %v1556 = vrcp.pop %v466
  %v1557 = vmul.f32 %v466, %v1556
  %v1558 = vsub.f32 1.0, %v1557
  %v1559 = vmul.f32 %v1556, %v1558
  %v1560 = vadd.f32 %v1556, %v1559
  %vm1561 = vweird.f32 %v466
  %vm1562 = vweird.f32 %v1556
  %vm1563 = vmor %vm1561, %vm1562
  %v1564 = vsel %vm1563, %v1556, %v1560
  %v1565 = vand.u32 2147483647, %v466
  %vm1566 = vcmp.eq.f32.partialorder %v1565, 8.507059e+37
  %v1567 = vand.u32 %v466, 2147483648
  %v1568 = vor.u32 1.1754944e-38, %v1567
  %v1569 = vsel %vm1566, %v1568, %v1564
  %v1570 = vmul.f32 1.0, %v1569
  %v1571 = vrcp.pop %v467
  %v1572 = vmul.f32 %v467, %v1571
  %v1573 = vsub.f32 1.0, %v1572
  %v1574 = vmul.f32 %v1571, %v1573
  %v1575 = vadd.f32 %v1571, %v1574
  %vm1576 = vweird.f32 %v467
  %vm1577 = vweird.f32 %v1571
  %vm1578 = vmor %vm1576, %vm1577
  %v1579 = vsel %vm1578, %v1571, %v1575
  %v1580 = vand.u32 2147483647, %v467
  %vm1581 = vcmp.eq.f32.partialorder %v1580, 8.507059e+37
  %v1582 = vand.u32 %v467, 2147483648
  %v1583 = vor.u32 1.1754944e-38, %v1582
  %v1584 = vsel %vm1581, %v1583, %v1579
  %v1585 = vmul.f32 1.0, %v1584
  %v1586 = vrcp.pop %v468
  %v1587 = vmul.f32 %v468, %v1586
  %v1588 = vsub.f32 1.0, %v1587
  %v1589 = vmul.f32 %v1586, %v1588
  %v1590 = vadd.f32 %v1586, %v1589
  %vm1591 = vweird.f32 %v468
  %vm1592 = vweird.f32 %v1586
  %vm1593 = vmor %vm1591, %vm1592
  %v1594 = vsel %vm1593, %v1586, %v1590
  %v1595 = vand.u32 2147483647, %v468
  %vm1596 = vcmp.eq.f32.partialorder %v1595, 8.507059e+37
  %v1597 = vand.u32 %v468, 2147483648
  %v1598 = vor.u32 1.1754944e-38, %v1597
  %v1599 = vsel %vm1596, %v1598, %v1594
  %v1600 = vmul.f32 1.0, %v1599
  %v1601 = vrcp.pop %v469
  %v1602 = vmul.f32 %v469, %v1601
  %v1603 = vsub.f32 1.0, %v1602
  %v1604 = vmul.f32 %v1601, %v1603
  %v1605 = vadd.f32 %v1601, %v1604
  %vm1606 = vweird.f32 %v469
  %vm1607 = vweird.f32 %v1601
  %vm1608 = vmor %vm1606, %vm1607
  %v1609 = vsel %vm1608, %v1601, %v1605
  %v1610 = vand.u32 2147483647, %v469
  %vm1611 = vcmp.eq.f32.partialorder %v1610, 8.507059e+37
  %v1612 = vand.u32 %v469, 2147483648
  %v1613 = vor.u32 1.1754944e-38, %v1612
  %v1614 = vsel %vm1611, %v1613, %v1609
  %v1615 = vmul.f32 1.0, %v1614
  %v1616 = vrcp.pop %v470
  %v1617 = vmul.f32 %v470, %v1616
  %v1618 = vsub.f32 1.0, %v1617
  %v1619 = vmul.f32 %v1616, %v1618
  %v1620 = vadd.f32 %v1616, %v1619
  %vm1621 = vweird.f32 %v470
  %vm1622 = vweird.f32 %v1616
  %vm1623 = vmor %vm1621, %vm1622
  %v1624 = vsel %vm1623, %v1616, %v1620
  %v1625 = vand.u32 2147483647, %v470
  %vm1626 = vcmp.eq.f32.partialorder %v1625, 8.507059e+37
  %v1627 = vand.u32 %v470, 2147483648
  %v1628 = vor.u32 1.1754944e-38, %v1627
  %v1629 = vsel %vm1626, %v1628, %v1624
  %v1630 = vmul.f32 1.0, %v1629
  %v1631 = vrcp.pop %v471
  %v1632 = vmul.f32 %v471, %v1631
  %v1633 = vsub.f32 1.0, %v1632
  %v1634 = vmul.f32 %v1631, %v1633
  %v1635 = vadd.f32 %v1631, %v1634
  %vm1636 = vweird.f32 %v471
  %vm1637 = vweird.f32 %v1631
  %vm1638 = vmor %vm1636, %vm1637
  %v1639 = vsel %vm1638, %v1631, %v1635
  %v1640 = vand.u32 2147483647, %v471
  %vm1641 = vcmp.eq.f32.partialorder %v1640, 8.507059e+37
  %v1642 = vand.u32 %v471, 2147483648
  %v1643 = vor.u32 1.1754944e-38, %v1642
  %v1644 = vsel %vm1641, %v1643, %v1639
  %v1645 = vmul.f32 1.0, %v1644
  %v1646 = vrcp.pop %v472
  %v1647 = vmul.f32 %v472, %v1646
  %v1648 = vsub.f32 1.0, %v1647
  %v1649 = vmul.f32 %v1646, %v1648
  %v1650 = vadd.f32 %v1646, %v1649
  %vm1651 = vweird.f32 %v472
  %vm1652 = vweird.f32 %v1646
  %vm1653 = vmor %vm1651, %vm1652
  %v1654 = vsel %vm1653, %v1646, %v1650
  %v1655 = vand.u32 2147483647, %v472
  %vm1656 = vcmp.eq.f32.partialorder %v1655, 8.507059e+37
  %v1657 = vand.u32 %v472, 2147483648
  %v1658 = vor.u32 1.1754944e-38, %v1657
  %v1659 = vsel %vm1656, %v1658, %v1654
  %v1660 = vmul.f32 1.0, %v1659
  %v1661 = vrcp.pop %v473
  %v1662 = vmul.f32 %v473, %v1661
  %v1663 = vsub.f32 1.0, %v1662
  %v1664 = vmul.f32 %v1661, %v1663
  %v1665 = vadd.f32 %v1661, %v1664
  %vm1666 = vweird.f32 %v473
  %vm1667 = vweird.f32 %v1661
  %vm1668 = vmor %vm1666, %vm1667
  %v1669 = vsel %vm1668, %v1661, %v1665
  %v1670 = vand.u32 2147483647, %v473
  %vm1671 = vcmp.eq.f32.partialorder %v1670, 8.507059e+37
  %v1672 = vand.u32 %v473, 2147483648
  %v1673 = vor.u32 1.1754944e-38, %v1672
  %v1674 = vsel %vm1671, %v1673, %v1669
  %v1675 = vmul.f32 1.0, %v1674
  %v1676 = vrcp.pop %v474
  %v1677 = vmul.f32 %v474, %v1676
  %v1678 = vsub.f32 1.0, %v1677
  %v1679 = vmul.f32 %v1676, %v1678
  %v1680 = vadd.f32 %v1676, %v1679
  %vm1681 = vweird.f32 %v474
  %vm1682 = vweird.f32 %v1676
  %vm1683 = vmor %vm1681, %vm1682
  %v1684 = vsel %vm1683, %v1676, %v1680
  %v1685 = vand.u32 2147483647, %v474
  %vm1686 = vcmp.eq.f32.partialorder %v1685, 8.507059e+37
  %v1687 = vand.u32 %v474, 2147483648
  %v1688 = vor.u32 1.1754944e-38, %v1687
  %v1689 = vsel %vm1686, %v1688, %v1684
  %v1690 = vmul.f32 1.0, %v1689
  %v1691 = vrcp.pop %v475
  %v1692 = vmul.f32 %v475, %v1691
  %v1693 = vsub.f32 1.0, %v1692
  %v1694 = vmul.f32 %v1691, %v1693
  %v1695 = vadd.f32 %v1691, %v1694
  %vm1696 = vweird.f32 %v475
  %vm1697 = vweird.f32 %v1691
  %vm1698 = vmor %vm1696, %vm1697
  %v1699 = vsel %vm1698, %v1691, %v1695
  %v1700 = vand.u32 2147483647, %v475
  %vm1701 = vcmp.eq.f32.partialorder %v1700, 8.507059e+37
  %v1702 = vand.u32 %v475, 2147483648
  %v1703 = vor.u32 1.1754944e-38, %v1702
  %v1704 = vsel %vm1701, %v1703, %v1699
  %v1705 = vmul.f32 1.0, %v1704
  %v1706 = vrcp.pop %v476
  %v1707 = vmul.f32 %v476, %v1706
  %v1708 = vsub.f32 1.0, %v1707
  %v1709 = vmul.f32 %v1706, %v1708
  %v1710 = vadd.f32 %v1706, %v1709
  %vm1711 = vweird.f32 %v476
  %vm1712 = vweird.f32 %v1706
  %vm1713 = vmor %vm1711, %vm1712
  %v1714 = vsel %vm1713, %v1706, %v1710
  %v1715 = vand.u32 2147483647, %v476
  %vm1716 = vcmp.eq.f32.partialorder %v1715, 8.507059e+37
  %v1717 = vand.u32 %v476, 2147483648
  %v1718 = vor.u32 1.1754944e-38, %v1717
  %v1719 = vsel %vm1716, %v1718, %v1714
  %v1720 = vmul.f32 1.0, %v1719
  %v1721 = vrcp.pop %v477
  %v1722 = vmul.f32 %v477, %v1721
  %v1723 = vsub.f32 1.0, %v1722
  %v1724 = vmul.f32 %v1721, %v1723
  %v1725 = vadd.f32 %v1721, %v1724
  %vm1726 = vweird.f32 %v477
  %vm1727 = vweird.f32 %v1721
  %vm1728 = vmor %vm1726, %vm1727
  %v1729 = vsel %vm1728, %v1721, %v1725
  %v1730 = vand.u32 2147483647, %v477
  %vm1731 = vcmp.eq.f32.partialorder %v1730, 8.507059e+37
  %v1732 = vand.u32 %v477, 2147483648
  %v1733 = vor.u32 1.1754944e-38, %v1732
  %v1734 = vsel %vm1731, %v1733, %v1729
  %v1735 = vmul.f32 1.0, %v1734
  %v1736 = vrcp.pop %v478
  %v1737 = vmul.f32 %v478, %v1736
  %v1738 = vsub.f32 1.0, %v1737
  %v1739 = vmul.f32 %v1736, %v1738
  %v1740 = vadd.f32 %v1736, %v1739
  %vm1741 = vweird.f32 %v478
  %vm1742 = vweird.f32 %v1736
  %vm1743 = vmor %vm1741, %vm1742
  %v1744 = vsel %vm1743, %v1736, %v1740
  %v1745 = vand.u32 2147483647, %v478
  %vm1746 = vcmp.eq.f32.partialorder %v1745, 8.507059e+37
  %v1747 = vand.u32 %v478, 2147483648
  %v1748 = vor.u32 1.1754944e-38, %v1747
  %v1749 = vsel %vm1746, %v1748, %v1744
  %v1750 = vmul.f32 1.0, %v1749
  %v1751 = vrcp.pop %v479
  %v1752 = vmul.f32 %v479, %v1751
  %v1753 = vsub.f32 1.0, %v1752
  %v1754 = vmul.f32 %v1751, %v1753
  %v1755 = vadd.f32 %v1751, %v1754
  %vm1756 = vweird.f32 %v479
  %vm1757 = vweird.f32 %v1751
  %vm1758 = vmor %vm1756, %vm1757
  %v1759 = vsel %vm1758, %v1751, %v1755
  %v1760 = vand.u32 2147483647, %v479
  %vm1761 = vcmp.eq.f32.partialorder %v1760, 8.507059e+37
  %v1762 = vand.u32 %v479, 2147483648
  %v1763 = vor.u32 1.1754944e-38, %v1762
  %v1764 = vsel %vm1761, %v1763, %v1759
  %v1765 = vmul.f32 1.0, %v1764
  %v1766 = vrcp.pop %v480
  %v1767 = vmul.f32 %v480, %v1766
  %v1768 = vsub.f32 1.0, %v1767
  %v1769 = vmul.f32 %v1766, %v1768
  %v1770 = vadd.f32 %v1766, %v1769
  %vm1771 = vweird.f32 %v480
  %vm1772 = vweird.f32 %v1766
  %vm1773 = vmor %vm1771, %vm1772
  %v1774 = vsel %vm1773, %v1766, %v1770
  %v1775 = vand.u32 2147483647, %v480
  %vm1776 = vcmp.eq.f32.partialorder %v1775, 8.507059e+37
  %v1777 = vand.u32 %v480, 2147483648
  %v1778 = vor.u32 1.1754944e-38, %v1777
  %v1779 = vsel %vm1776, %v1778, %v1774
  %v1780 = vmul.f32 1.0, %v1779
  %v1781 = vrcp.pop %v481
  %v1782 = vmul.f32 %v481, %v1781
  %v1783 = vsub.f32 1.0, %v1782
  %v1784 = vmul.f32 %v1781, %v1783
  %v1785 = vadd.f32 %v1781, %v1784
  %vm1786 = vweird.f32 %v481
  %vm1787 = vweird.f32 %v1781
  %vm1788 = vmor %vm1786, %vm1787
  %v1789 = vsel %vm1788, %v1781, %v1785
  %v1790 = vand.u32 2147483647, %v481
  %vm1791 = vcmp.eq.f32.partialorder %v1790, 8.507059e+37
  %v1792 = vand.u32 %v481, 2147483648
  %v1793 = vor.u32 1.1754944e-38, %v1792
  %v1794 = vsel %vm1791, %v1793, %v1789
  %v1795 = vmul.f32 1.0, %v1794
  %v1796 = vrcp.pop %v482
  %v1797 = vmul.f32 %v482, %v1796
  %v1798 = vsub.f32 1.0, %v1797
  %v1799 = vmul.f32 %v1796, %v1798
  %v1800 = vadd.f32 %v1796, %v1799
  %vm1801 = vweird.f32 %v482
  %vm1802 = vweird.f32 %v1796
  %vm1803 = vmor %vm1801, %vm1802
  %v1804 = vsel %vm1803, %v1796, %v1800
  %v1805 = vand.u32 2147483647, %v482
  %vm1806 = vcmp.eq.f32.partialorder %v1805, 8.507059e+37
  %v1807 = vand.u32 %v482, 2147483648
  %v1808 = vor.u32 1.1754944e-38, %v1807
  %v1809 = vsel %vm1806, %v1808, %v1804
  %v1810 = vmul.f32 1.0, %v1809
  %v1811 = vrcp.pop %v483
  %v1812 = vmul.f32 %v483, %v1811
  %v1813 = vsub.f32 1.0, %v1812
  %v1814 = vmul.f32 %v1811, %v1813
  %v1815 = vadd.f32 %v1811, %v1814
  %vm1816 = vweird.f32 %v483
  %vm1817 = vweird.f32 %v1811
  %vm1818 = vmor %vm1816, %vm1817
  %v1819 = vsel %vm1818, %v1811, %v1815
  %v1820 = vand.u32 2147483647, %v483
  %vm1821 = vcmp.eq.f32.partialorder %v1820, 8.507059e+37
  %v1822 = vand.u32 %v483, 2147483648
  %v1823 = vor.u32 1.1754944e-38, %v1822
  %v1824 = vsel %vm1821, %v1823, %v1819
  %v1825 = vmul.f32 1.0, %v1824
  %v1826 = vrcp.pop %v484
  %v1827 = vmul.f32 %v484, %v1826
  %v1828 = vsub.f32 1.0, %v1827
  %v1829 = vmul.f32 %v1826, %v1828
  %v1830 = vadd.f32 %v1826, %v1829
  %vm1831 = vweird.f32 %v484
  %vm1832 = vweird.f32 %v1826
  %vm1833 = vmor %vm1831, %vm1832
  %v1834 = vsel %vm1833, %v1826, %v1830
  %v1835 = vand.u32 2147483647, %v484
  %vm1836 = vcmp.eq.f32.partialorder %v1835, 8.507059e+37
  %v1837 = vand.u32 %v484, 2147483648
  %v1838 = vor.u32 1.1754944e-38, %v1837
  %v1839 = vsel %vm1836, %v1838, %v1834
  %v1840 = vmul.f32 1.0, %v1839
  %v1841 = vrcp.pop %v485
  %v1842 = vmul.f32 %v485, %v1841
  %v1843 = vsub.f32 1.0, %v1842
  %v1844 = vmul.f32 %v1841, %v1843
  %v1845 = vadd.f32 %v1841, %v1844
  %vm1846 = vweird.f32 %v485
  %vm1847 = vweird.f32 %v1841
  %vm1848 = vmor %vm1846, %vm1847
  %v1849 = vsel %vm1848, %v1841, %v1845
  %v1850 = vand.u32 2147483647, %v485
  %vm1851 = vcmp.eq.f32.partialorder %v1850, 8.507059e+37
  %v1852 = vand.u32 %v485, 2147483648
  %v1853 = vor.u32 1.1754944e-38, %v1852
  %v1854 = vsel %vm1851, %v1853, %v1849
  %v1855 = vmul.f32 1.0, %v1854
  %v1856 = vrcp.pop %v486
  %v1857 = vmul.f32 %v486, %v1856
  %v1858 = vsub.f32 1.0, %v1857
  %v1859 = vmul.f32 %v1856, %v1858
  %v1860 = vadd.f32 %v1856, %v1859
  %vm1861 = vweird.f32 %v486
  %vm1862 = vweird.f32 %v1856
  %vm1863 = vmor %vm1861, %vm1862
  %v1864 = vsel %vm1863, %v1856, %v1860
  %v1865 = vand.u32 2147483647, %v486
  %vm1866 = vcmp.eq.f32.partialorder %v1865, 8.507059e+37
  %v1867 = vand.u32 %v486, 2147483648
  %v1868 = vor.u32 1.1754944e-38, %v1867
  %v1869 = vsel %vm1866, %v1868, %v1864
  %v1870 = vmul.f32 1.0, %v1869
  %v1871 = vrcp.pop %v487
  %v1872 = vmul.f32 %v487, %v1871
  %v1873 = vsub.f32 1.0, %v1872
  %v1874 = vmul.f32 %v1871, %v1873
  %v1875 = vadd.f32 %v1871, %v1874
  %vm1876 = vweird.f32 %v487
  %vm1877 = vweird.f32 %v1871
  %vm1878 = vmor %vm1876, %vm1877
  %v1879 = vsel %vm1878, %v1871, %v1875
  %v1880 = vand.u32 2147483647, %v487
  %vm1881 = vcmp.eq.f32.partialorder %v1880, 8.507059e+37
  %v1882 = vand.u32 %v487, 2147483648
  %v1883 = vor.u32 1.1754944e-38, %v1882
  %v1884 = vsel %vm1881, %v1883, %v1879
  %v1885 = vmul.f32 1.0, %v1884
  %v1886 = vrcp.pop %v488
  %v1887 = vmul.f32 %v488, %v1886
  %v1888 = vsub.f32 1.0, %v1887
  %v1889 = vmul.f32 %v1886, %v1888
  %v1890 = vadd.f32 %v1886, %v1889
  %vm1891 = vweird.f32 %v488
  %vm1892 = vweird.f32 %v1886
  %vm1893 = vmor %vm1891, %vm1892
  %v1894 = vsel %vm1893, %v1886, %v1890
  %v1895 = vand.u32 2147483647, %v488
  %vm1896 = vcmp.eq.f32.partialorder %v1895, 8.507059e+37
  %v1897 = vand.u32 %v488, 2147483648
  %v1898 = vor.u32 1.1754944e-38, %v1897
  %v1899 = vsel %vm1896, %v1898, %v1894
  %v1900 = vmul.f32 1.0, %v1899
  %v1901 = vrcp.pop %v489
  %v1902 = vmul.f32 %v489, %v1901
  %v1903 = vsub.f32 1.0, %v1902
  %v1904 = vmul.f32 %v1901, %v1903
  %v1905 = vadd.f32 %v1901, %v1904
  %vm1906 = vweird.f32 %v489
  %vm1907 = vweird.f32 %v1901
  %vm1908 = vmor %vm1906, %vm1907
  %v1909 = vsel %vm1908, %v1901, %v1905
  %v1910 = vand.u32 2147483647, %v489
  %vm1911 = vcmp.eq.f32.partialorder %v1910, 8.507059e+37
  %v1912 = vand.u32 %v489, 2147483648
  %v1913 = vor.u32 1.1754944e-38, %v1912
  %v1914 = vsel %vm1911, %v1913, %v1909
  %v1915 = vmul.f32 1.0, %v1914
  %v1916 = vrcp.pop %v490
  %v1917 = vmul.f32 %v490, %v1916
  %v1918 = vsub.f32 1.0, %v1917
  %v1919 = vmul.f32 %v1916, %v1918
  %v1920 = vadd.f32 %v1916, %v1919
  %vm1921 = vweird.f32 %v490
  %vm1922 = vweird.f32 %v1916
  %vm1923 = vmor %vm1921, %vm1922
  %v1924 = vsel %vm1923, %v1916, %v1920
  %v1925 = vand.u32 2147483647, %v490
  %vm1926 = vcmp.eq.f32.partialorder %v1925, 8.507059e+37
  %v1927 = vand.u32 %v490, 2147483648
  %v1928 = vor.u32 1.1754944e-38, %v1927
  %v1929 = vsel %vm1926, %v1928, %v1924
  %v1930 = vmul.f32 1.0, %v1929
  %v1931 = vld [vmem:[%s1] sm:$0xff]
  %v1932 = vld [vmem:[%s1 + $0x8] sm:$0xff]
  %v1933 = vld [vmem:[%s1 + $0x10] sm:$0xff]
  %v1934 = vld [vmem:[%s1 + $0x18] sm:$0xff]
  %v1935 = vld [vmem:[%s1 + $0x20] sm:$0xff]
  %v1936 = vld [vmem:[%s1 + $0x28] sm:$0xff]
  %v1937 = vld [vmem:[%s1 + $0x30] sm:$0xff]
  %v1938 = vld [vmem:[%s1 + $0x38] sm:$0xff]
  %v1939 = vld [vmem:[%s1 + $0x40] sm:$0xff]
  %v1940 = vld [vmem:[%s1 + $0x48] sm:$0xff]
  %v1941 = vld [vmem:[%s1 + $0x50] sm:$0xff]
  %v1942 = vld [vmem:[%s1 + $0x58] sm:$0xff]
  %v1943 = vld [vmem:[%s1 + $0x60] sm:$0xff]
  %v1944 = vld [vmem:[%s1 + $0x68] sm:$0xff]
  %v1945 = vld [vmem:[%s1 + $0x70] sm:$0xff]
  %v1946 = vld [vmem:[%s1 + $0x78] sm:$0xff]
  %v1947 = vld [vmem:[%s1 + $0x80] sm:$0xff]
  %v1948 = vld [vmem:[%s1 + $0x88] sm:$0xff]
  %v1949 = vld [vmem:[%s1 + $0x90] sm:$0xff]
  %v1950 = vld [vmem:[%s1 + $0x98] sm:$0xff]
  %v1951 = vld [vmem:[%s1 + $0xa0] sm:$0xff]
  %v1952 = vld [vmem:[%s1 + $0xa8] sm:$0xff]
  %v1953 = vld [vmem:[%s1 + $0xb0] sm:$0xff]
  %v1954 = vld [vmem:[%s1 + $0xb8] sm:$0xff]
  %v1955 = vld [vmem:[%s1 + $0xc0] sm:$0xff]
  %v1956 = vld [vmem:[%s1 + $0xc8] sm:$0xff]
  %v1957 = vld [vmem:[%s1 + $0xd0] sm:$0xff]
  %v1958 = vld [vmem:[%s1 + $0xd8] sm:$0xff]
  %v1959 = vld [vmem:[%s1 + $0xe0] sm:$0xff]
  %v1960 = vld [vmem:[%s1 + $0xe8] sm:$0xff]
  %v1961 = vld [vmem:[%s1 + $0xf0] sm:$0xff]
  %v1962 = vld [vmem:[%s1 + $0xf8] sm:$0xff]
  %v1963 = vld [vmem:[%s1 + $0x100] sm:$0xff]
  %v1964 = vld [vmem:[%s1 + $0x108] sm:$0xff]
  %v1965 = vld [vmem:[%s1 + $0x110] sm:$0xff]
  %v1966 = vld [vmem:[%s1 + $0x118] sm:$0xff]
  %v1967 = vld [vmem:[%s1 + $0x120] sm:$0xff]
  %v1968 = vld [vmem:[%s1 + $0x128] sm:$0xff]
  %v1969 = vld [vmem:[%s1 + $0x130] sm:$0xff]
  %v1970 = vld [vmem:[%s1 + $0x138] sm:$0xff]
  %v1971 = vld [vmem:[%s1 + $0x140] sm:$0xff]
  %v1972 = vld [vmem:[%s1 + $0x148] sm:$0xff]
  %v1973 = vld [vmem:[%s1 + $0x150] sm:$0xff]
  %v1974 = vld [vmem:[%s1 + $0x158] sm:$0xff]
  %v1975 = vld [vmem:[%s1 + $0x160] sm:$0xff]
  %v1976 = vld [vmem:[%s1 + $0x168] sm:$0xff]
  %v1977 = vld [vmem:[%s1 + $0x170] sm:$0xff]
  %v1978 = vld [vmem:[%s1 + $0x178] sm:$0xff]
  %v1979 = vld [vmem:[%s1 + $0x180] sm:$0xff]
  %v1980 = vld [vmem:[%s1 + $0x188] sm:$0xff]
  %v1981 = vld [vmem:[%s1 + $0x190] sm:$0xff]
  %v1982 = vld [vmem:[%s1 + $0x198] sm:$0xff]
  %v1983 = vld [vmem:[%s1 + $0x1a0] sm:$0xff]
  %v1984 = vld [vmem:[%s1 + $0x1a8] sm:$0xff]
  %v1985 = vld [vmem:[%s1 + $0x1b0] sm:$0xff]
  %v1986 = vld [vmem:[%s1 + $0x1b8] sm:$0xff]
  %v1987 = vld [vmem:[%s1 + $0x1c0] sm:$0xff]
  %v1988 = vld [vmem:[%s1 + $0x1c8] sm:$0xff]
  %v1989 = vld [vmem:[%s1 + $0x1d0] sm:$0xff]
  %v1990 = vld [vmem:[%s1 + $0x1d8] sm:$0xff]
  %v1991 = vld [vmem:[%s1 + $0x1e0] sm:$0xff]
  %v1992 = vld [vmem:[%s1 + $0x1e8] sm:$0xff]
  %v1993 = vld [vmem:[%s1 + $0x1f0] sm:$0xff]
  %v1994 = vld [vmem:[%s1 + $0x1f8] sm:$0xff]
  %v1995 = vld [vmem:[%s1 + $0x200] sm:$0xff]
  %v1996 = vld [vmem:[%s1 + $0x208] sm:$0xff]
  %v1997 = vld [vmem:[%s1 + $0x210] sm:$0xff]
  %v1998 = vld [vmem:[%s1 + $0x218] sm:$0xff]
  %v1999 = vld [vmem:[%s1 + $0x220] sm:$0xff]
  %v2000 = vld [vmem:[%s1 + $0x228] sm:$0xff]
  %v2001 = vld [vmem:[%s1 + $0x230] sm:$0xff]
  %v2002 = vld [vmem:[%s1 + $0x238] sm:$0xff]
  %v2003 = vld [vmem:[%s1 + $0x240] sm:$0xff]
  %v2004 = vld [vmem:[%s1 + $0x248] sm:$0xff]
  %v2005 = vld [vmem:[%s1 + $0x250] sm:$0xff]
  %v2006 = vld [vmem:[%s1 + $0x258] sm:$0xff]
  %v2007 = vld [vmem:[%s1 + $0x260] sm:$0xff]
  %v2008 = vld [vmem:[%s1 + $0x268] sm:$0xff]
  %v2009 = vld [vmem:[%s1 + $0x270] sm:$0xff]
  %v2010 = vld [vmem:[%s1 + $0x278] sm:$0xff]
  %v2011 = vld [vmem:[%s1 + $0x280] sm:$0xff]
  %v2012 = vld [vmem:[%s1 + $0x288] sm:$0xff]
  %v2013 = vld [vmem:[%s1 + $0x290] sm:$0xff]
  %v2014 = vld [vmem:[%s1 + $0x298] sm:$0xff]
  %v2015 = vld [vmem:[%s1 + $0x2a0] sm:$0xff]
  %v2016 = vld [vmem:[%s1 + $0x2a8] sm:$0xff]
  %v2017 = vld [vmem:[%s1 + $0x2b0] sm:$0xff]
  %v2018 = vld [vmem:[%s1 + $0x2b8] sm:$0xff]
  %v2019 = vld [vmem:[%s1 + $0x2c0] sm:$0xff]
  %v2020 = vld [vmem:[%s1 + $0x2c8] sm:$0xff]
  %v2021 = vld [vmem:[%s1 + $0x2d0] sm:$0xff]
  %v2022 = vld [vmem:[%s1 + $0x2d8] sm:$0xff]
  %v2023 = vld [vmem:[%s1 + $0x2e0] sm:$0xff]
  %v2024 = vld [vmem:[%s1 + $0x2e8] sm:$0xff]
  %v2025 = vld [vmem:[%s1 + $0x2f0] sm:$0xff]
  %v2026 = vld [vmem:[%s1 + $0x2f8] sm:$0xff]
  %v2027 = vld [vmem:[%s1 + $0x300] sm:$0xff]
  %v2028 = vld [vmem:[%s1 + $0x308] sm:$0xff]
  %v2029 = vld [vmem:[%s1 + $0x310] sm:$0xff]
  %v2030 = vld [vmem:[%s1 + $0x318] sm:$0xff]
  %v2031 = vld [vmem:[%s1 + $0x320] sm:$0xff]
  %v2032 = vld [vmem:[%s1 + $0x328] sm:$0xff]
  %v2033 = vld [vmem:[%s1 + $0x330] sm:$0xff]
  %v2034 = vld [vmem:[%s1 + $0x338] sm:$0xff]
  %v2035 = vld [vmem:[%s1 + $0x340] sm:$0xff]
  %v2036 = vld [vmem:[%s1 + $0x348] sm:$0xff]
  %v2037 = vld [vmem:[%s1 + $0x350] sm:$0xff]
  %v2038 = vld [vmem:[%s1 + $0x358] sm:$0xff]
  %v2039 = vld [vmem:[%s1 + $0x360] sm:$0xff]
  %v2040 = vld [vmem:[%s1 + $0x368] sm:$0xff]
  %v2041 = vld [vmem:[%s1 + $0x370] sm:$0xff]
  %v2042 = vld [vmem:[%s1 + $0x378] sm:$0xff]
  %v2043 = vld [vmem:[%s1 + $0x380] sm:$0xff]
  %v2044 = vld [vmem:[%s1 + $0x388] sm:$0xff]
  %v2045 = vld [vmem:[%s1 + $0x390] sm:$0xff]
  %v2046 = vld [vmem:[%s1 + $0x398] sm:$0xff]
  %v2047 = vld [vmem:[%s1 + $0x3a0] sm:$0xff]
  %v2048 = vld [vmem:[%s1 + $0x3a8] sm:$0xff]
  %v2049 = vld [vmem:[%s1 + $0x3b0] sm:$0xff]
  %v2050 = vld [vmem:[%s1 + $0x3b8] sm:$0xff]
  %v2051 = vld [vmem:[%s1 + $0x3c0] sm:$0xff]
  %v2052 = vld [vmem:[%s1 + $0x3c8] sm:$0xff]
  %v2053 = vld [vmem:[%s1 + $0x3d0] sm:$0xff]
  %v2054 = vld [vmem:[%s1 + $0x3d8] sm:$0xff]
  %v2055 = vld [vmem:[%s1 + $0x3e0] sm:$0xff]
  %v2056 = vld [vmem:[%s1 + $0x3e8] sm:$0xff]
  %v2057 = vld [vmem:[%s1 + $0x3f0] sm:$0xff]
  %v2058 = vld [vmem:[%s1 + $0x3f8] sm:$0xff]
  %v2059 = vld [vmem:[%s1 + $0x400] sm:$0xff]
  %v2060 = vld [vmem:[%s1 + $0x408] sm:$0xff]
  %v2061 = vld [vmem:[%s1 + $0x410] sm:$0xff]
  %v2062 = vld [vmem:[%s1 + $0x418] sm:$0xff]
  %v2063 = vld [vmem:[%s1 + $0x420] sm:$0xff]
  %v2064 = vld [vmem:[%s1 + $0x428] sm:$0xff]
  %v2065 = vld [vmem:[%s1 + $0x430] sm:$0xff]
  %v2066 = vld [vmem:[%s1 + $0x438] sm:$0xff]
  %v2067 = vld [vmem:[%s1 + $0x440] sm:$0xff]
  %v2068 = vld [vmem:[%s1 + $0x448] sm:$0xff]
  %v2069 = vld [vmem:[%s1 + $0x450] sm:$0xff]
  %v2070 = vld [vmem:[%s1 + $0x458] sm:$0xff]
  %v2071 = vld [vmem:[%s1 + $0x460] sm:$0xff]
  %v2072 = vld [vmem:[%s1 + $0x468] sm:$0xff]
  %v2073 = vld [vmem:[%s1 + $0x470] sm:$0xff]
  %v2074 = vld [vmem:[%s1 + $0x478] sm:$0xff]
  %v2075 = vld [vmem:[%s1 + $0x480] sm:$0xff]
  %v2076 = vld [vmem:[%s1 + $0x488] sm:$0xff]
  %v2077 = vld [vmem:[%s1 + $0x490] sm:$0xff]
  %v2078 = vld [vmem:[%s1 + $0x498] sm:$0xff]
  %v2079 = vld [vmem:[%s1 + $0x4a0] sm:$0xff]
  %v2080 = vld [vmem:[%s1 + $0x4a8] sm:$0xff]
  %v2081 = vld [vmem:[%s1 + $0x4b0] sm:$0xff]
  %v2082 = vld [vmem:[%s1 + $0x4b8] sm:$0xff]
  %v2083 = vld [vmem:[%s1 + $0x4c0] sm:$0xff]
  %v2084 = vld [vmem:[%s1 + $0x4c8] sm:$0xff]
  %v2085 = vld [vmem:[%s1 + $0x4d0] sm:$0xff]
  %v2086 = vld [vmem:[%s1 + $0x4d8] sm:$0xff]
  %v2087 = vld [vmem:[%s1 + $0x4e0] sm:$0xff]
  %v2088 = vld [vmem:[%s1 + $0x4e8] sm:$0xff]
  %v2089 = vld [vmem:[%s1 + $0x4f0] sm:$0xff]
  %v2090 = vld [vmem:[%s1 + $0x4f8] sm:$0xff]
  %v2091 = vld [vmem:[%s1 + $0x500] sm:$0xff]
  %v2092 = vld [vmem:[%s1 + $0x508] sm:$0xff]
  %v2093 = vld [vmem:[%s1 + $0x510] sm:$0xff]
  %v2094 = vld [vmem:[%s1 + $0x518] sm:$0xff]
  %v2095 = vld [vmem:[%s1 + $0x520] sm:$0xff]
  %v2096 = vld [vmem:[%s1 + $0x528] sm:$0xff]
  %v2097 = vld [vmem:[%s1 + $0x530] sm:$0xff]
  %v2098 = vld [vmem:[%s1 + $0x538] sm:$0xff]
  %v2099 = vld [vmem:[%s1 + $0x540] sm:$0xff]
  %v2100 = vld [vmem:[%s1 + $0x548] sm:$0xff]
  %v2101 = vld [vmem:[%s1 + $0x550] sm:$0xff]
  %v2102 = vld [vmem:[%s1 + $0x558] sm:$0xff]
  %v2103 = vld [vmem:[%s1 + $0x560] sm:$0xff]
  %v2104 = vld [vmem:[%s1 + $0x568] sm:$0xff]
  %v2105 = vld [vmem:[%s1 + $0x570] sm:$0xff]
  %v2106 = vld [vmem:[%s1 + $0x578] sm:$0xff]
  %v2107 = vld [vmem:[%s1 + $0x580] sm:$0xff]
  %v2108 = vld [vmem:[%s1 + $0x588] sm:$0xff]
  %v2109 = vld [vmem:[%s1 + $0x590] sm:$0xff]
  %v2110 = vld [vmem:[%s1 + $0x598] sm:$0xff]
  %v2111 = vld [vmem:[%s1 + $0x5a0] sm:$0xff]
  %v2112 = vld [vmem:[%s1 + $0x5a8] sm:$0xff]
  %v2113 = vld [vmem:[%s1 + $0x5b0] sm:$0xff]
  %v2114 = vld [vmem:[%s1 + $0x5b8] sm:$0xff]
  %v2115 = vld [vmem:[%s1 + $0x5c0] sm:$0xff]
  %v2116 = vld [vmem:[%s1 + $0x5c8] sm:$0xff]
  %v2117 = vld [vmem:[%s1 + $0x5d0] sm:$0xff]
  %v2118 = vld [vmem:[%s1 + $0x5d8] sm:$0xff]
  %v2119 = vld [vmem:[%s1 + $0x5e0] sm:$0xff]
  %v2120 = vld [vmem:[%s1 + $0x5e8] sm:$0xff]
  %v2121 = vld [vmem:[%s1 + $0x5f0] sm:$0xff]
  %v2122 = vld [vmem:[%s1 + $0x5f8] sm:$0xff]
  %2124 = vset.pattern.permute.xlu0 0
  %2125 = vperm.xlu0 %2124, %v505
  %v2126 = vpop.permute.xlu0 %2125
  %2129 = vset.pattern.permute.xlu0 0
  %2130 = vperm.xlu0 %2129, %v520
  %v2131 = vpop.permute.xlu0 %2130
  %2134 = vset.pattern.permute.xlu0 0
  %2135 = vperm.xlu0 %2134, %v535
  %v2136 = vpop.permute.xlu0 %2135
  %2139 = vset.pattern.permute.xlu0 0
  %2140 = vperm.xlu0 %2139, %v550
  %v2141 = vpop.permute.xlu0 %2140
  %2144 = vset.pattern.permute.xlu0 0
  %2145 = vperm.xlu0 %2144, %v565
  %v2146 = vpop.permute.xlu0 %2145
  %2149 = vset.pattern.permute.xlu0 0
  %2150 = vperm.xlu0 %2149, %v580
  %v2151 = vpop.permute.xlu0 %2150
  %2154 = vset.pattern.permute.xlu0 0
  %2155 = vperm.xlu0 %2154, %v595
  %v2156 = vpop.permute.xlu0 %2155
  %2159 = vset.pattern.permute.xlu0 0
  %2160 = vperm.xlu0 %2159, %v610
  %v2161 = vpop.permute.xlu0 %2160
  %2164 = vset.pattern.permute.xlu0 0
  %2165 = vperm.xlu0 %2164, %v625
  %v2166 = vpop.permute.xlu0 %2165
  %2169 = vset.pattern.permute.xlu0 0
  %2170 = vperm.xlu0 %2169, %v640
  %v2171 = vpop.permute.xlu0 %2170
  %2174 = vset.pattern.permute.xlu0 0
  %2175 = vperm.xlu0 %2174, %v655
  %v2176 = vpop.permute.xlu0 %2175
  %2179 = vset.pattern.permute.xlu0 0
  %2180 = vperm.xlu0 %2179, %v670
  %v2181 = vpop.permute.xlu0 %2180
  %2184 = vset.pattern.permute.xlu0 0
  %2185 = vperm.xlu0 %2184, %v685
  %v2186 = vpop.permute.xlu0 %2185
  %2189 = vset.pattern.permute.xlu0 0
  %2190 = vperm.xlu0 %2189, %v700
  %v2191 = vpop.permute.xlu0 %2190
  %2194 = vset.pattern.permute.xlu0 0
  %2195 = vperm.xlu0 %2194, %v715
  %v2196 = vpop.permute.xlu0 %2195
  %2199 = vset.pattern.permute.xlu0 0
  %2200 = vperm.xlu0 %2199, %v730
  %v2201 = vpop.permute.xlu0 %2200
  %2204 = vset.pattern.permute.xlu0 0
  %2205 = vperm.xlu0 %2204, %v745
  %v2206 = vpop.permute.xlu0 %2205
  %2209 = vset.pattern.permute.xlu0 0
  %2210 = vperm.xlu0 %2209, %v760
  %v2211 = vpop.permute.xlu0 %2210
  %2214 = vset.pattern.permute.xlu0 0
  %2215 = vperm.xlu0 %2214, %v775
  %v2216 = vpop.permute.xlu0 %2215
  %2219 = vset.pattern.permute.xlu0 0
  %2220 = vperm.xlu0 %2219, %v790
  %v2221 = vpop.permute.xlu0 %2220
  %2224 = vset.pattern.permute.xlu0 0
  %2225 = vperm.xlu0 %2224, %v805
  %v2226 = vpop.permute.xlu0 %2225
  %2229 = vset.pattern.permute.xlu0 0
  %2230 = vperm.xlu0 %2229, %v820
  %v2231 = vpop.permute.xlu0 %2230
  %2234 = vset.pattern.permute.xlu0 0
  %2235 = vperm.xlu0 %2234, %v835
  %v2236 = vpop.permute.xlu0 %2235
  %2239 = vset.pattern.permute.xlu0 0
  %2240 = vperm.xlu0 %2239, %v850
  %v2241 = vpop.permute.xlu0 %2240
  %2244 = vset.pattern.permute.xlu0 0
  %2245 = vperm.xlu0 %2244, %v865
  %v2246 = vpop.permute.xlu0 %2245
  %2249 = vset.pattern.permute.xlu0 0
  %2250 = vperm.xlu0 %2249, %v880
  %v2251 = vpop.permute.xlu0 %2250
  %2254 = vset.pattern.permute.xlu0 0
  %2255 = vperm.xlu0 %2254, %v895
  %v2256 = vpop.permute.xlu0 %2255
  %2259 = vset.pattern.permute.xlu0 0
  %2260 = vperm.xlu0 %2259, %v910
  %v2261 = vpop.permute.xlu0 %2260
  %2264 = vset.pattern.permute.xlu0 0
  %2265 = vperm.xlu0 %2264, %v925
  %v2266 = vpop.permute.xlu0 %2265
  %2269 = vset.pattern.permute.xlu0 0
  %2270 = vperm.xlu0 %2269, %v940
  %v2271 = vpop.permute.xlu0 %2270
  %2274 = vset.pattern.permute.xlu0 0
  %2275 = vperm.xlu0 %2274, %v955
  %v2276 = vpop.permute.xlu0 %2275
  %2279 = vset.pattern.permute.xlu0 0
  %2280 = vperm.xlu0 %2279, %v970
  %v2281 = vpop.permute.xlu0 %2280
  %2284 = vset.pattern.permute.xlu0 0
  %2285 = vperm.xlu0 %2284, %v985
  %v2286 = vpop.permute.xlu0 %2285
  %2289 = vset.pattern.permute.xlu0 0
  %2290 = vperm.xlu0 %2289, %v1000
  %v2291 = vpop.permute.xlu0 %2290
  %2294 = vset.pattern.permute.xlu0 0
  %2295 = vperm.xlu0 %2294, %v1015
  %v2296 = vpop.permute.xlu0 %2295
  %2299 = vset.pattern.permute.xlu0 0
  %2300 = vperm.xlu0 %2299, %v1030
  %v2301 = vpop.permute.xlu0 %2300
  %2304 = vset.pattern.permute.xlu0 0
  %2305 = vperm.xlu0 %2304, %v1045
  %v2306 = vpop.permute.xlu0 %2305
  %2309 = vset.pattern.permute.xlu0 0
  %2310 = vperm.xlu0 %2309, %v1060
  %v2311 = vpop.permute.xlu0 %2310
  %2314 = vset.pattern.permute.xlu0 0
  %2315 = vperm.xlu0 %2314, %v1075
  %v2316 = vpop.permute.xlu0 %2315
  %2319 = vset.pattern.permute.xlu0 0
  %2320 = vperm.xlu0 %2319, %v1090
  %v2321 = vpop.permute.xlu0 %2320
  %2324 = vset.pattern.permute.xlu0 0
  %2325 = vperm.xlu0 %2324, %v1105
  %v2326 = vpop.permute.xlu0 %2325
  %2329 = vset.pattern.permute.xlu0 0
  %2330 = vperm.xlu0 %2329, %v1120
  %v2331 = vpop.permute.xlu0 %2330
  %2334 = vset.pattern.permute.xlu0 0
  %2335 = vperm.xlu0 %2334, %v1135
  %v2336 = vpop.permute.xlu0 %2335
  %2339 = vset.pattern.permute.xlu0 0
  %2340 = vperm.xlu0 %2339, %v1150
  %v2341 = vpop.permute.xlu0 %2340
  %2344 = vset.pattern.permute.xlu0 0
  %2345 = vperm.xlu0 %2344, %v1165
  %v2346 = vpop.permute.xlu0 %2345
  %2349 = vset.pattern.permute.xlu0 0
  %2350 = vperm.xlu0 %2349, %v1180
  %v2351 = vpop.permute.xlu0 %2350
  %2354 = vset.pattern.permute.xlu0 0
  %2355 = vperm.xlu0 %2354, %v1195
  %v2356 = vpop.permute.xlu0 %2355
  %2359 = vset.pattern.permute.xlu0 0
  %2360 = vperm.xlu0 %2359, %v1210
  %v2361 = vpop.permute.xlu0 %2360
  %2364 = vset.pattern.permute.xlu0 0
  %2365 = vperm.xlu0 %2364, %v1225
  %v2366 = vpop.permute.xlu0 %2365
  %2369 = vset.pattern.permute.xlu0 0
  %2370 = vperm.xlu0 %2369, %v1240
  %v2371 = vpop.permute.xlu0 %2370
  %2374 = vset.pattern.permute.xlu0 0
  %2375 = vperm.xlu0 %2374, %v1255
  %v2376 = vpop.permute.xlu0 %2375
  %2379 = vset.pattern.permute.xlu0 0
  %2380 = vperm.xlu0 %2379, %v1270
  %v2381 = vpop.permute.xlu0 %2380
  %2384 = vset.pattern.permute.xlu0 0
  %2385 = vperm.xlu0 %2384, %v1285
  %v2386 = vpop.permute.xlu0 %2385
  %2389 = vset.pattern.permute.xlu0 0
  %2390 = vperm.xlu0 %2389, %v1300
  %v2391 = vpop.permute.xlu0 %2390
  %2394 = vset.pattern.permute.xlu0 0
  %2395 = vperm.xlu0 %2394, %v1315
  %v2396 = vpop.permute.xlu0 %2395
  %2399 = vset.pattern.permute.xlu0 0
  %2400 = vperm.xlu0 %2399, %v1330
  %v2401 = vpop.permute.xlu0 %2400
  %2404 = vset.pattern.permute.xlu0 0
  %2405 = vperm.xlu0 %2404, %v1345
  %v2406 = vpop.permute.xlu0 %2405
  %2409 = vset.pattern.permute.xlu0 0
  %2410 = vperm.xlu0 %2409, %v1360
  %v2411 = vpop.permute.xlu0 %2410
  %2414 = vset.pattern.permute.xlu0 0
  %2415 = vperm.xlu0 %2414, %v1375
  %v2416 = vpop.permute.xlu0 %2415
  %2419 = vset.pattern.permute.xlu0 0
  %2420 = vperm.xlu0 %2419, %v1390
  %v2421 = vpop.permute.xlu0 %2420
  %2424 = vset.pattern.permute.xlu0 0
  %2425 = vperm.xlu0 %2424, %v1405
  %v2426 = vpop.permute.xlu0 %2425
  %2429 = vset.pattern.permute.xlu0 0
  %2430 = vperm.xlu0 %2429, %v1420
  %v2431 = vpop.permute.xlu0 %2430
  %2434 = vset.pattern.permute.xlu0 0
  %2435 = vperm.xlu0 %2434, %v1435
  %v2436 = vpop.permute.xlu0 %2435
  %2439 = vset.pattern.permute.xlu0 0
  %2440 = vperm.xlu0 %2439, %v1450
  %v2441 = vpop.permute.xlu0 %2440
  %2444 = vset.pattern.permute.xlu0 0
  %2445 = vperm.xlu0 %2444, %v1465
  %v2446 = vpop.permute.xlu0 %2445
  %2449 = vset.pattern.permute.xlu0 0
  %2450 = vperm.xlu0 %2449, %v1480
  %v2451 = vpop.permute.xlu0 %2450
  %2454 = vset.pattern.permute.xlu0 0
  %2455 = vperm.xlu0 %2454, %v1495
  %v2456 = vpop.permute.xlu0 %2455
  %2459 = vset.pattern.permute.xlu0 0
  %2460 = vperm.xlu0 %2459, %v1510
  %v2461 = vpop.permute.xlu0 %2460
  %2464 = vset.pattern.permute.xlu0 0
  %2465 = vperm.xlu0 %2464, %v1525
  %v2466 = vpop.permute.xlu0 %2465
  %2469 = vset.pattern.permute.xlu0 0
  %2470 = vperm.xlu0 %2469, %v1540
  %v2471 = vpop.permute.xlu0 %2470
  %2474 = vset.pattern.permute.xlu0 0
  %2475 = vperm.xlu0 %2474, %v1555
  %v2476 = vpop.permute.xlu0 %2475
  %2479 = vset.pattern.permute.xlu0 0
  %2480 = vperm.xlu0 %2479, %v1570
  %v2481 = vpop.permute.xlu0 %2480
  %2484 = vset.pattern.permute.xlu0 0
  %2485 = vperm.xlu0 %2484, %v1585
  %v2486 = vpop.permute.xlu0 %2485
  %2489 = vset.pattern.permute.xlu0 0
  %2490 = vperm.xlu0 %2489, %v1600
  %v2491 = vpop.permute.xlu0 %2490
  %2494 = vset.pattern.permute.xlu0 0
  %2495 = vperm.xlu0 %2494, %v1615
  %v2496 = vpop.permute.xlu0 %2495
  %2499 = vset.pattern.permute.xlu0 0
  %2500 = vperm.xlu0 %2499, %v1630
  %v2501 = vpop.permute.xlu0 %2500
  %2504 = vset.pattern.permute.xlu0 0
  %2505 = vperm.xlu0 %2504, %v1645
  %v2506 = vpop.permute.xlu0 %2505
  %2509 = vset.pattern.permute.xlu0 0
  %2510 = vperm.xlu0 %2509, %v1660
  %v2511 = vpop.permute.xlu0 %2510
  %2514 = vset.pattern.permute.xlu0 0
  %2515 = vperm.xlu0 %2514, %v1675
  %v2516 = vpop.permute.xlu0 %2515
  %2519 = vset.pattern.permute.xlu0 0
  %2520 = vperm.xlu0 %2519, %v1690
  %v2521 = vpop.permute.xlu0 %2520
  %2524 = vset.pattern.permute.xlu0 0
  %2525 = vperm.xlu0 %2524, %v1705
  %v2526 = vpop.permute.xlu0 %2525
  %2529 = vset.pattern.permute.xlu0 0
  %2530 = vperm.xlu0 %2529, %v1720
  %v2531 = vpop.permute.xlu0 %2530
  %2534 = vset.pattern.permute.xlu0 0
  %2535 = vperm.xlu0 %2534, %v1735
  %v2536 = vpop.permute.xlu0 %2535
  %2539 = vset.pattern.permute.xlu0 0
  %2540 = vperm.xlu0 %2539, %v1750
  %v2541 = vpop.permute.xlu0 %2540
  %2544 = vset.pattern.permute.xlu0 0
  %2545 = vperm.xlu0 %2544, %v1765
  %v2546 = vpop.permute.xlu0 %2545
  %2549 = vset.pattern.permute.xlu0 0
  %2550 = vperm.xlu0 %2549, %v1780
  %v2551 = vpop.permute.xlu0 %2550
  %2554 = vset.pattern.permute.xlu0 0
  %2555 = vperm.xlu0 %2554, %v1795
  %v2556 = vpop.permute.xlu0 %2555
  %2559 = vset.pattern.permute.xlu0 0
  %2560 = vperm.xlu0 %2559, %v1810
  %v2561 = vpop.permute.xlu0 %2560
  %2564 = vset.pattern.permute.xlu0 0
  %2565 = vperm.xlu0 %2564, %v1825
  %v2566 = vpop.permute.xlu0 %2565
  %2569 = vset.pattern.permute.xlu0 0
  %2570 = vperm.xlu0 %2569, %v1840
  %v2571 = vpop.permute.xlu0 %2570
  %2574 = vset.pattern.permute.xlu0 0
  %2575 = vperm.xlu0 %2574, %v1855
  %v2576 = vpop.permute.xlu0 %2575
  %2579 = vset.pattern.permute.xlu0 0
  %2580 = vperm.xlu0 %2579, %v1870
  %v2581 = vpop.permute.xlu0 %2580
  %2584 = vset.pattern.permute.xlu0 0
  %2585 = vperm.xlu0 %2584, %v1885
  %v2586 = vpop.permute.xlu0 %2585
  %2589 = vset.pattern.permute.xlu0 0
  %2590 = vperm.xlu0 %2589, %v1900
  %v2591 = vpop.permute.xlu0 %2590
  %2594 = vset.pattern.permute.xlu0 0
  %2595 = vperm.xlu0 %2594, %v1915
  %v2596 = vpop.permute.xlu0 %2595
  %2599 = vset.pattern.permute.xlu0 0
  %2600 = vperm.xlu0 %2599, %v1930
  %v2601 = vpop.permute.xlu0 %2600
  %v2603 = vmul.f32 %v2126, %v1931
  %v2604 = vmul.f32 %v2126, %v1932
  %v2605 = vmul.f32 %v2131, %v1933
  %v2606 = vmul.f32 %v2131, %v1934
  %v2607 = vmul.f32 %v2136, %v1935
  %v2608 = vmul.f32 %v2136, %v1936
  %v2609 = vmul.f32 %v2141, %v1937
  %v2610 = vmul.f32 %v2141, %v1938
  %v2611 = vmul.f32 %v2146, %v1939
  %v2612 = vmul.f32 %v2146, %v1940
  %v2613 = vmul.f32 %v2151, %v1941
  %v2614 = vmul.f32 %v2151, %v1942
  %v2615 = vmul.f32 %v2156, %v1943
  %v2616 = vmul.f32 %v2156, %v1944
  %v2617 = vmul.f32 %v2161, %v1945
  %v2618 = vmul.f32 %v2161, %v1946
  %v2619 = vmul.f32 %v2166, %v1947
  %v2620 = vmul.f32 %v2166, %v1948
  %v2621 = vmul.f32 %v2171, %v1949
  %v2622 = vmul.f32 %v2171, %v1950
  %v2623 = vmul.f32 %v2176, %v1951
  %v2624 = vmul.f32 %v2176, %v1952
  %v2625 = vmul.f32 %v2181, %v1953
  %v2626 = vmul.f32 %v2181, %v1954
  %v2627 = vmul.f32 %v2186, %v1955
  %v2628 = vmul.f32 %v2186, %v1956
  %v2629 = vmul.f32 %v2191, %v1957
  %v2630 = vmul.f32 %v2191, %v1958
  %v2631 = vmul.f32 %v2196, %v1959
  %v2632 = vmul.f32 %v2196, %v1960
  %v2633 = vmul.f32 %v2201, %v1961
  %v2634 = vmul.f32 %v2201, %v1962
  %v2635 = vmul.f32 %v2206, %v1963
  %v2636 = vmul.f32 %v2206, %v1964
  %v2637 = vmul.f32 %v2211, %v1965
  %v2638 = vmul.f32 %v2211, %v1966
  %v2639 = vmul.f32 %v2216, %v1967
  %v2640 = vmul.f32 %v2216, %v1968
  %v2641 = vmul.f32 %v2221, %v1969
  %v2642 = vmul.f32 %v2221, %v1970
  %v2643 = vmul.f32 %v2226, %v1971
  %v2644 = vmul.f32 %v2226, %v1972
  %v2645 = vmul.f32 %v2231, %v1973
  %v2646 = vmul.f32 %v2231, %v1974
  %v2647 = vmul.f32 %v2236, %v1975
  %v2648 = vmul.f32 %v2236, %v1976
  %v2649 = vmul.f32 %v2241, %v1977
  %v2650 = vmul.f32 %v2241, %v1978
  %v2651 = vmul.f32 %v2246, %v1979
  %v2652 = vmul.f32 %v2246, %v1980
  %v2653 = vmul.f32 %v2251, %v1981
  %v2654 = vmul.f32 %v2251, %v1982
  %v2655 = vmul.f32 %v2256, %v1983
  %v2656 = vmul.f32 %v2256, %v1984
  %v2657 = vmul.f32 %v2261, %v1985
  %v2658 = vmul.f32 %v2261, %v1986
  %v2659 = vmul.f32 %v2266, %v1987
  %v2660 = vmul.f32 %v2266, %v1988
  %v2661 = vmul.f32 %v2271, %v1989
  %v2662 = vmul.f32 %v2271, %v1990
  %v2663 = vmul.f32 %v2276, %v1991
  %v2664 = vmul.f32 %v2276, %v1992
  %v2665 = vmul.f32 %v2281, %v1993
  %v2666 = vmul.f32 %v2281, %v1994
  %v2667 = vmul.f32 %v2286, %v1995
  %v2668 = vmul.f32 %v2286, %v1996
  %v2669 = vmul.f32 %v2291, %v1997
  %v2670 = vmul.f32 %v2291, %v1998
  %v2671 = vmul.f32 %v2296, %v1999
  %v2672 = vmul.f32 %v2296, %v2000
  %v2673 = vmul.f32 %v2301, %v2001
  %v2674 = vmul.f32 %v2301, %v2002
  %v2675 = vmul.f32 %v2306, %v2003
  %v2676 = vmul.f32 %v2306, %v2004
  %v2677 = vmul.f32 %v2311, %v2005
  %v2678 = vmul.f32 %v2311, %v2006
  %v2679 = vmul.f32 %v2316, %v2007
  %v2680 = vmul.f32 %v2316, %v2008
  %v2681 = vmul.f32 %v2321, %v2009
  %v2682 = vmul.f32 %v2321, %v2010
  %v2683 = vmul.f32 %v2326, %v2011
  %v2684 = vmul.f32 %v2326, %v2012
  %v2685 = vmul.f32 %v2331, %v2013
  %v2686 = vmul.f32 %v2331, %v2014
  %v2687 = vmul.f32 %v2336, %v2015
  %v2688 = vmul.f32 %v2336, %v2016
  %v2689 = vmul.f32 %v2341, %v2017
  %v2690 = vmul.f32 %v2341, %v2018
  %v2691 = vmul.f32 %v2346, %v2019
  %v2692 = vmul.f32 %v2346, %v2020
  %v2693 = vmul.f32 %v2351, %v2021
  %v2694 = vmul.f32 %v2351, %v2022
  %v2695 = vmul.f32 %v2356, %v2023
  %v2696 = vmul.f32 %v2356, %v2024
  %v2697 = vmul.f32 %v2361, %v2025
  %v2698 = vmul.f32 %v2361, %v2026
  %v2699 = vmul.f32 %v2366, %v2027
  %v2700 = vmul.f32 %v2366, %v2028
  %v2701 = vmul.f32 %v2371, %v2029
  %v2702 = vmul.f32 %v2371, %v2030
  %v2703 = vmul.f32 %v2376, %v2031
  %v2704 = vmul.f32 %v2376, %v2032
  %v2705 = vmul.f32 %v2381, %v2033
  %v2706 = vmul.f32 %v2381, %v2034
  %v2707 = vmul.f32 %v2386, %v2035
  %v2708 = vmul.f32 %v2386, %v2036
  %v2709 = vmul.f32 %v2391, %v2037
  %v2710 = vmul.f32 %v2391, %v2038
  %v2711 = vmul.f32 %v2396, %v2039
  %v2712 = vmul.f32 %v2396, %v2040
  %v2713 = vmul.f32 %v2401, %v2041
  %v2714 = vmul.f32 %v2401, %v2042
  %v2715 = vmul.f32 %v2406, %v2043
  %v2716 = vmul.f32 %v2406, %v2044
  %v2717 = vmul.f32 %v2411, %v2045
  %v2718 = vmul.f32 %v2411, %v2046
  %v2719 = vmul.f32 %v2416, %v2047
  %v2720 = vmul.f32 %v2416, %v2048
  %v2721 = vmul.f32 %v2421, %v2049
  %v2722 = vmul.f32 %v2421, %v2050
  %v2723 = vmul.f32 %v2426, %v2051
  %v2724 = vmul.f32 %v2426, %v2052
  %v2725 = vmul.f32 %v2431, %v2053
  %v2726 = vmul.f32 %v2431, %v2054
  %v2727 = vmul.f32 %v2436, %v2055
  %v2728 = vmul.f32 %v2436, %v2056
  %v2729 = vmul.f32 %v2441, %v2057
  %v2730 = vmul.f32 %v2441, %v2058
  %v2731 = vmul.f32 %v2446, %v2059
  %v2732 = vmul.f32 %v2446, %v2060
  %v2733 = vmul.f32 %v2451, %v2061
  %v2734 = vmul.f32 %v2451, %v2062
  %v2735 = vmul.f32 %v2456, %v2063
  %v2736 = vmul.f32 %v2456, %v2064
  %v2737 = vmul.f32 %v2461, %v2065
  %v2738 = vmul.f32 %v2461, %v2066
  %v2739 = vmul.f32 %v2466, %v2067
  %v2740 = vmul.f32 %v2466, %v2068
  %v2741 = vmul.f32 %v2471, %v2069
  %v2742 = vmul.f32 %v2471, %v2070
  %v2743 = vmul.f32 %v2476, %v2071
  %v2744 = vmul.f32 %v2476, %v2072
  %v2745 = vmul.f32 %v2481, %v2073
  %v2746 = vmul.f32 %v2481, %v2074
  %v2747 = vmul.f32 %v2486, %v2075
  %v2748 = vmul.f32 %v2486, %v2076
  %v2749 = vmul.f32 %v2491, %v2077
  %v2750 = vmul.f32 %v2491, %v2078
  %v2751 = vmul.f32 %v2496, %v2079
  %v2752 = vmul.f32 %v2496, %v2080
  %v2753 = vmul.f32 %v2501, %v2081
  %v2754 = vmul.f32 %v2501, %v2082
  %v2755 = vmul.f32 %v2506, %v2083
  %v2756 = vmul.f32 %v2506, %v2084
  %v2757 = vmul.f32 %v2511, %v2085
  %v2758 = vmul.f32 %v2511, %v2086
  %v2759 = vmul.f32 %v2516, %v2087
  %v2760 = vmul.f32 %v2516, %v2088
  %v2761 = vmul.f32 %v2521, %v2089
  %v2762 = vmul.f32 %v2521, %v2090
  %v2763 = vmul.f32 %v2526, %v2091
  %v2764 = vmul.f32 %v2526, %v2092
  %v2765 = vmul.f32 %v2531, %v2093
  %v2766 = vmul.f32 %v2531, %v2094
  %v2767 = vmul.f32 %v2536, %v2095
  %v2768 = vmul.f32 %v2536, %v2096
  %v2769 = vmul.f32 %v2541, %v2097
  %v2770 = vmul.f32 %v2541, %v2098
  %v2771 = vmul.f32 %v2546, %v2099
  %v2772 = vmul.f32 %v2546, %v2100
  %v2773 = vmul.f32 %v2551, %v2101
  %v2774 = vmul.f32 %v2551, %v2102
  %v2775 = vmul.f32 %v2556, %v2103
  %v2776 = vmul.f32 %v2556, %v2104
  %v2777 = vmul.f32 %v2561, %v2105
  %v2778 = vmul.f32 %v2561, %v2106
  %v2779 = vmul.f32 %v2566, %v2107
  %v2780 = vmul.f32 %v2566, %v2108
  %v2781 = vmul.f32 %v2571, %v2109
  %v2782 = vmul.f32 %v2571, %v2110
  %v2783 = vmul.f32 %v2576, %v2111
  %v2784 = vmul.f32 %v2576, %v2112
  %v2785 = vmul.f32 %v2581, %v2113
  %v2786 = vmul.f32 %v2581, %v2114
  %v2787 = vmul.f32 %v2586, %v2115
  %v2788 = vmul.f32 %v2586, %v2116
  %v2789 = vmul.f32 %v2591, %v2117
  %v2790 = vmul.f32 %v2591, %v2118
  %v2791 = vmul.f32 %v2596, %v2119
  %v2792 = vmul.f32 %v2596, %v2120
  %v2793 = vmul.f32 %v2601, %v2121
  %v2794 = vmul.f32 %v2601, %v2122
  %2795 = vst [vmem:[%s2] sm:$0xff] %v2603
  %vm2796 = vcmask 556032
  %2797 = vst.msk [vmem:[%s2 + $0x8] sm:$0xff] %vm2796, %v2604
  %2798 = vst [vmem:[%s2 + $0x10] sm:$0xff] %v2605
  %2799 = vst.msk [vmem:[%s2 + $0x18] sm:$0xff] %vm2796, %v2606
  %2800 = vst [vmem:[%s2 + $0x20] sm:$0xff] %v2607
  %2801 = vst.msk [vmem:[%s2 + $0x28] sm:$0xff] %vm2796, %v2608
  %2802 = vst [vmem:[%s2 + $0x30] sm:$0xff] %v2609
  %2803 = vst.msk [vmem:[%s2 + $0x38] sm:$0xff] %vm2796, %v2610
  %2804 = vst [vmem:[%s2 + $0x40] sm:$0xff] %v2611
  %2805 = vst.msk [vmem:[%s2 + $0x48] sm:$0xff] %vm2796, %v2612
  %2806 = vst [vmem:[%s2 + $0x50] sm:$0xff] %v2613
  %2807 = vst.msk [vmem:[%s2 + $0x58] sm:$0xff] %vm2796, %v2614
  %2808 = vst [vmem:[%s2 + $0x60] sm:$0xff] %v2615
  %2809 = vst.msk [vmem:[%s2 + $0x68] sm:$0xff] %vm2796, %v2616
  %2810 = vst [vmem:[%s2 + $0x70] sm:$0xff] %v2617
  %2811 = vst.msk [vmem:[%s2 + $0x78] sm:$0xff] %vm2796, %v2618
  %2812 = vst [vmem:[%s2 + $0x80] sm:$0xff] %v2619
  %2813 = vst.msk [vmem:[%s2 + $0x88] sm:$0xff] %vm2796, %v2620
  %2814 = vst [vmem:[%s2 + $0x90] sm:$0xff] %v2621
  %2815 = vst.msk [vmem:[%s2 + $0x98] sm:$0xff] %vm2796, %v2622
  %2816 = vst [vmem:[%s2 + $0xa0] sm:$0xff] %v2623
  %2817 = vst.msk [vmem:[%s2 + $0xa8] sm:$0xff] %vm2796, %v2624
  %2818 = vst [vmem:[%s2 + $0xb0] sm:$0xff] %v2625
  %2819 = vst.msk [vmem:[%s2 + $0xb8] sm:$0xff] %vm2796, %v2626
  %2820 = vst [vmem:[%s2 + $0xc0] sm:$0xff] %v2627
  %2821 = vst.msk [vmem:[%s2 + $0xc8] sm:$0xff] %vm2796, %v2628
  %2822 = vst [vmem:[%s2 + $0xd0] sm:$0xff] %v2629
  %2823 = vst.msk [vmem:[%s2 + $0xd8] sm:$0xff] %vm2796, %v2630
  %2824 = vst [vmem:[%s2 + $0xe0] sm:$0xff] %v2631
  %2825 = vst.msk [vmem:[%s2 + $0xe8] sm:$0xff] %vm2796, %v2632
  %2826 = vst [vmem:[%s2 + $0xf0] sm:$0xff] %v2633
  %2827 = vst.msk [vmem:[%s2 + $0xf8] sm:$0xff] %vm2796, %v2634
  %2828 = vst [vmem:[%s2 + $0x100] sm:$0xff] %v2635
  %2829 = vst.msk [vmem:[%s2 + $0x108] sm:$0xff] %vm2796, %v2636
  %2830 = vst [vmem:[%s2 + $0x110] sm:$0xff] %v2637
  %2831 = vst.msk [vmem:[%s2 + $0x118] sm:$0xff] %vm2796, %v2638
  %2832 = vst [vmem:[%s2 + $0x120] sm:$0xff] %v2639
  %2833 = vst.msk [vmem:[%s2 + $0x128] sm:$0xff] %vm2796, %v2640
  %2834 = vst [vmem:[%s2 + $0x130] sm:$0xff] %v2641
  %2835 = vst.msk [vmem:[%s2 + $0x138] sm:$0xff] %vm2796, %v2642
  %2836 = vst [vmem:[%s2 + $0x140] sm:$0xff] %v2643
  %2837 = vst.msk [vmem:[%s2 + $0x148] sm:$0xff] %vm2796, %v2644
  %2838 = vst [vmem:[%s2 + $0x150] sm:$0xff] %v2645
  %2839 = vst.msk [vmem:[%s2 + $0x158] sm:$0xff] %vm2796, %v2646
  %2840 = vst [vmem:[%s2 + $0x160] sm:$0xff] %v2647
  %2841 = vst.msk [vmem:[%s2 + $0x168] sm:$0xff] %vm2796, %v2648
  %2842 = vst [vmem:[%s2 + $0x170] sm:$0xff] %v2649
  %2843 = vst.msk [vmem:[%s2 + $0x178] sm:$0xff] %vm2796, %v2650
  %2844 = vst [vmem:[%s2 + $0x180] sm:$0xff] %v2651
  %2845 = vst.msk [vmem:[%s2 + $0x188] sm:$0xff] %vm2796, %v2652
  %2846 = vst [vmem:[%s2 + $0x190] sm:$0xff] %v2653
  %2847 = vst.msk [vmem:[%s2 + $0x198] sm:$0xff] %vm2796, %v2654
  %2848 = vst [vmem:[%s2 + $0x1a0] sm:$0xff] %v2655
  %2849 = vst.msk [vmem:[%s2 + $0x1a8] sm:$0xff] %vm2796, %v2656
  %2850 = vst [vmem:[%s2 + $0x1b0] sm:$0xff] %v2657
  %2851 = vst.msk [vmem:[%s2 + $0x1b8] sm:$0xff] %vm2796, %v2658
  %2852 = vst [vmem:[%s2 + $0x1c0] sm:$0xff] %v2659
  %2853 = vst.msk [vmem:[%s2 + $0x1c8] sm:$0xff] %vm2796, %v2660
  %2854 = vst [vmem:[%s2 + $0x1d0] sm:$0xff] %v2661
  %2855 = vst.msk [vmem:[%s2 + $0x1d8] sm:$0xff] %vm2796, %v2662
  %2856 = vst [vmem:[%s2 + $0x1e0] sm:$0xff] %v2663
  %2857 = vst.msk [vmem:[%s2 + $0x1e8] sm:$0xff] %vm2796, %v2664
  %2858 = vst [vmem:[%s2 + $0x1f0] sm:$0xff] %v2665
  %2859 = vst.msk [vmem:[%s2 + $0x1f8] sm:$0xff] %vm2796, %v2666
  %2860 = vst [vmem:[%s2 + $0x200] sm:$0xff] %v2667
  %2861 = vst.msk [vmem:[%s2 + $0x208] sm:$0xff] %vm2796, %v2668
  %2862 = vst [vmem:[%s2 + $0x210] sm:$0xff] %v2669
  %2863 = vst.msk [vmem:[%s2 + $0x218] sm:$0xff] %vm2796, %v2670
  %2864 = vst [vmem:[%s2 + $0x220] sm:$0xff] %v2671
  %2865 = vst.msk [vmem:[%s2 + $0x228] sm:$0xff] %vm2796, %v2672
  %2866 = vst [vmem:[%s2 + $0x230] sm:$0xff] %v2673
  %2867 = vst.msk [vmem:[%s2 + $0x238] sm:$0xff] %vm2796, %v2674
  %2868 = vst [vmem:[%s2 + $0x240] sm:$0xff] %v2675
  %2869 = vst.msk [vmem:[%s2 + $0x248] sm:$0xff] %vm2796, %v2676
  %2870 = vst [vmem:[%s2 + $0x250] sm:$0xff] %v2677
  %2871 = vst.msk [vmem:[%s2 + $0x258] sm:$0xff] %vm2796, %v2678
  %2872 = vst [vmem:[%s2 + $0x260] sm:$0xff] %v2679
  %2873 = vst.msk [vmem:[%s2 + $0x268] sm:$0xff] %vm2796, %v2680
  %2874 = vst [vmem:[%s2 + $0x270] sm:$0xff] %v2681
  %2875 = vst.msk [vmem:[%s2 + $0x278] sm:$0xff] %vm2796, %v2682
  %2876 = vst [vmem:[%s2 + $0x280] sm:$0xff] %v2683
  %2877 = vst.msk [vmem:[%s2 + $0x288] sm:$0xff] %vm2796, %v2684
  %2878 = vst [vmem:[%s2 + $0x290] sm:$0xff] %v2685
  %2879 = vst.msk [vmem:[%s2 + $0x298] sm:$0xff] %vm2796, %v2686
  %2880 = vst [vmem:[%s2 + $0x2a0] sm:$0xff] %v2687
  %2881 = vst.msk [vmem:[%s2 + $0x2a8] sm:$0xff] %vm2796, %v2688
  %2882 = vst [vmem:[%s2 + $0x2b0] sm:$0xff] %v2689
  %2883 = vst.msk [vmem:[%s2 + $0x2b8] sm:$0xff] %vm2796, %v2690
  %2884 = vst [vmem:[%s2 + $0x2c0] sm:$0xff] %v2691
  %2885 = vst.msk [vmem:[%s2 + $0x2c8] sm:$0xff] %vm2796, %v2692
  %2886 = vst [vmem:[%s2 + $0x2d0] sm:$0xff] %v2693
  %2887 = vst.msk [vmem:[%s2 + $0x2d8] sm:$0xff] %vm2796, %v2694
  %2888 = vst [vmem:[%s2 + $0x2e0] sm:$0xff] %v2695
  %2889 = vst.msk [vmem:[%s2 + $0x2e8] sm:$0xff] %vm2796, %v2696
  %2890 = vst [vmem:[%s2 + $0x2f0] sm:$0xff] %v2697
  %2891 = vst.msk [vmem:[%s2 + $0x2f8] sm:$0xff] %vm2796, %v2698
  %2892 = vst [vmem:[%s2 + $0x300] sm:$0xff] %v2699
  %2893 = vst.msk [vmem:[%s2 + $0x308] sm:$0xff] %vm2796, %v2700
  %2894 = vst [vmem:[%s2 + $0x310] sm:$0xff] %v2701
  %2895 = vst.msk [vmem:[%s2 + $0x318] sm:$0xff] %vm2796, %v2702
  %2896 = vst [vmem:[%s2 + $0x320] sm:$0xff] %v2703
  %2897 = vst.msk [vmem:[%s2 + $0x328] sm:$0xff] %vm2796, %v2704
  %2898 = vst [vmem:[%s2 + $0x330] sm:$0xff] %v2705
  %2899 = vst.msk [vmem:[%s2 + $0x338] sm:$0xff] %vm2796, %v2706
  %2900 = vst [vmem:[%s2 + $0x340] sm:$0xff] %v2707
  %2901 = vst.msk [vmem:[%s2 + $0x348] sm:$0xff] %vm2796, %v2708
  %2902 = vst [vmem:[%s2 + $0x350] sm:$0xff] %v2709
  %2903 = vst.msk [vmem:[%s2 + $0x358] sm:$0xff] %vm2796, %v2710
  %2904 = vst [vmem:[%s2 + $0x360] sm:$0xff] %v2711
  %2905 = vst.msk [vmem:[%s2 + $0x368] sm:$0xff] %vm2796, %v2712
  %2906 = vst [vmem:[%s2 + $0x370] sm:$0xff] %v2713
  %2907 = vst.msk [vmem:[%s2 + $0x378] sm:$0xff] %vm2796, %v2714
  %2908 = vst [vmem:[%s2 + $0x380] sm:$0xff] %v2715
  %2909 = vst.msk [vmem:[%s2 + $0x388] sm:$0xff] %vm2796, %v2716
  %2910 = vst [vmem:[%s2 + $0x390] sm:$0xff] %v2717
  %2911 = vst.msk [vmem:[%s2 + $0x398] sm:$0xff] %vm2796, %v2718
  %2912 = vst [vmem:[%s2 + $0x3a0] sm:$0xff] %v2719
  %2913 = vst.msk [vmem:[%s2 + $0x3a8] sm:$0xff] %vm2796, %v2720
  %2914 = vst [vmem:[%s2 + $0x3b0] sm:$0xff] %v2721
  %2915 = vst.msk [vmem:[%s2 + $0x3b8] sm:$0xff] %vm2796, %v2722
  %2916 = vst [vmem:[%s2 + $0x3c0] sm:$0xff] %v2723
  %2917 = vst.msk [vmem:[%s2 + $0x3c8] sm:$0xff] %vm2796, %v2724
  %2918 = vst [vmem:[%s2 + $0x3d0] sm:$0xff] %v2725
  %2919 = vst.msk [vmem:[%s2 + $0x3d8] sm:$0xff] %vm2796, %v2726
  %2920 = vst [vmem:[%s2 + $0x3e0] sm:$0xff] %v2727
  %2921 = vst.msk [vmem:[%s2 + $0x3e8] sm:$0xff] %vm2796, %v2728
  %2922 = vst [vmem:[%s2 + $0x3f0] sm:$0xff] %v2729
  %2923 = vst.msk [vmem:[%s2 + $0x3f8] sm:$0xff] %vm2796, %v2730
  %2924 = vst [vmem:[%s2 + $0x400] sm:$0xff] %v2731
  %2925 = vst.msk [vmem:[%s2 + $0x408] sm:$0xff] %vm2796, %v2732
  %2926 = vst [vmem:[%s2 + $0x410] sm:$0xff] %v2733
  %2927 = vst.msk [vmem:[%s2 + $0x418] sm:$0xff] %vm2796, %v2734
  %2928 = vst [vmem:[%s2 + $0x420] sm:$0xff] %v2735
  %2929 = vst.msk [vmem:[%s2 + $0x428] sm:$0xff] %vm2796, %v2736
  %2930 = vst [vmem:[%s2 + $0x430] sm:$0xff] %v2737
  %2931 = vst.msk [vmem:[%s2 + $0x438] sm:$0xff] %vm2796, %v2738
  %2932 = vst [vmem:[%s2 + $0x440] sm:$0xff] %v2739
  %2933 = vst.msk [vmem:[%s2 + $0x448] sm:$0xff] %vm2796, %v2740
  %2934 = vst [vmem:[%s2 + $0x450] sm:$0xff] %v2741
  %2935 = vst.msk [vmem:[%s2 + $0x458] sm:$0xff] %vm2796, %v2742
  %2936 = vst [vmem:[%s2 + $0x460] sm:$0xff] %v2743
  %2937 = vst.msk [vmem:[%s2 + $0x468] sm:$0xff] %vm2796, %v2744
  %2938 = vst [vmem:[%s2 + $0x470] sm:$0xff] %v2745
  %2939 = vst.msk [vmem:[%s2 + $0x478] sm:$0xff] %vm2796, %v2746
  %2940 = vst [vmem:[%s2 + $0x480] sm:$0xff] %v2747
  %2941 = vst.msk [vmem:[%s2 + $0x488] sm:$0xff] %vm2796, %v2748
  %2942 = vst [vmem:[%s2 + $0x490] sm:$0xff] %v2749
  %2943 = vst.msk [vmem:[%s2 + $0x498] sm:$0xff] %vm2796, %v2750
  %2944 = vst [vmem:[%s2 + $0x4a0] sm:$0xff] %v2751
  %2945 = vst.msk [vmem:[%s2 + $0x4a8] sm:$0xff] %vm2796, %v2752
  %2946 = vst [vmem:[%s2 + $0x4b0] sm:$0xff] %v2753
  %2947 = vst.msk [vmem:[%s2 + $0x4b8] sm:$0xff] %vm2796, %v2754
  %2948 = vst [vmem:[%s2 + $0x4c0] sm:$0xff] %v2755
  %2949 = vst.msk [vmem:[%s2 + $0x4c8] sm:$0xff] %vm2796, %v2756
  %2950 = vst [vmem:[%s2 + $0x4d0] sm:$0xff] %v2757
  %2951 = vst.msk [vmem:[%s2 + $0x4d8] sm:$0xff] %vm2796, %v2758
  %2952 = vst [vmem:[%s2 + $0x4e0] sm:$0xff] %v2759
  %2953 = vst.msk [vmem:[%s2 + $0x4e8] sm:$0xff] %vm2796, %v2760
  %2954 = vst [vmem:[%s2 + $0x4f0] sm:$0xff] %v2761
  %2955 = vst.msk [vmem:[%s2 + $0x4f8] sm:$0xff] %vm2796, %v2762
  %2956 = vst [vmem:[%s2 + $0x500] sm:$0xff] %v2763
  %2957 = vst.msk [vmem:[%s2 + $0x508] sm:$0xff] %vm2796, %v2764
  %2958 = vst [vmem:[%s2 + $0x510] sm:$0xff] %v2765
  %2959 = vst.msk [vmem:[%s2 + $0x518] sm:$0xff] %vm2796, %v2766
  %2960 = vst [vmem:[%s2 + $0x520] sm:$0xff] %v2767
  %2961 = vst.msk [vmem:[%s2 + $0x528] sm:$0xff] %vm2796, %v2768
  %2962 = vst [vmem:[%s2 + $0x530] sm:$0xff] %v2769
  %2963 = vst.msk [vmem:[%s2 + $0x538] sm:$0xff] %vm2796, %v2770
  %2964 = vst [vmem:[%s2 + $0x540] sm:$0xff] %v2771
  %2965 = vst.msk [vmem:[%s2 + $0x548] sm:$0xff] %vm2796, %v2772
  %2966 = vst [vmem:[%s2 + $0x550] sm:$0xff] %v2773
  %2967 = vst.msk [vmem:[%s2 + $0x558] sm:$0xff] %vm2796, %v2774
  %2968 = vst [vmem:[%s2 + $0x560] sm:$0xff] %v2775
  %2969 = vst.msk [vmem:[%s2 + $0x568] sm:$0xff] %vm2796, %v2776
  %2970 = vst [vmem:[%s2 + $0x570] sm:$0xff] %v2777
  %2971 = vst.msk [vmem:[%s2 + $0x578] sm:$0xff] %vm2796, %v2778
  %2972 = vst [vmem:[%s2 + $0x580] sm:$0xff] %v2779
  %2973 = vst.msk [vmem:[%s2 + $0x588] sm:$0xff] %vm2796, %v2780
  %2974 = vst [vmem:[%s2 + $0x590] sm:$0xff] %v2781
  %2975 = vst.msk [vmem:[%s2 + $0x598] sm:$0xff] %vm2796, %v2782
  %2976 = vst [vmem:[%s2 + $0x5a0] sm:$0xff] %v2783
  %2977 = vst.msk [vmem:[%s2 + $0x5a8] sm:$0xff] %vm2796, %v2784
  %2978 = vst [vmem:[%s2 + $0x5b0] sm:$0xff] %v2785
  %2979 = vst.msk [vmem:[%s2 + $0x5b8] sm:$0xff] %vm2796, %v2786
  %2980 = vst [vmem:[%s2 + $0x5c0] sm:$0xff] %v2787
  %2981 = vst.msk [vmem:[%s2 + $0x5c8] sm:$0xff] %vm2796, %v2788
  %2982 = vst [vmem:[%s2 + $0x5d0] sm:$0xff] %v2789
  %2983 = vst.msk [vmem:[%s2 + $0x5d8] sm:$0xff] %vm2796, %v2790
  %2984 = vst [vmem:[%s2 + $0x5e0] sm:$0xff] %v2791
  %2985 = vst.msk [vmem:[%s2 + $0x5e8] sm:$0xff] %vm2796, %v2792
  %2986 = vst [vmem:[%s2 + $0x5f0] sm:$0xff] %v2793
  %2987 = vst.msk [vmem:[%s2 + $0x5f8] sm:$0xff] %vm2796, %v2794
  // Predicated region
  $region10: #{tpu_custom_call.1} parent=0 // pred_check
    _
  $region11: #{tpu_custom_call.1} parent=0 // pred_check_branch
    %2989 = sbr.rel (0) target = $region13
  $region12: #{tpu_custom_call.1} parent=0 // pred_region
    _
  $region13: #{tpu_custom_call.1} parent=0 // pred_fallthru
    _
  // Predicated region
  $region14: #{tpu_custom_call.1} parent=0 // pred_check
    _
  $region15: #{tpu_custom_call.1} parent=0 // pred_check_branch
    %2991 = sbr.rel (0) target = $region17
  $region16: #{tpu_custom_call.1} parent=0 // pred_region
    _
  $region17: #{tpu_custom_call.1} parent=0 // pred_fallthru
    _

</llo_original>
